<compile_context>
chip_gen: v7x
topology: tpu7x:2x2x1
jax: 0.10.0
libtpu: 0.0.40
codegen_flags: <defaults>
</compile_context>

<pallas_src>
import functools

import jax
import jax.numpy as jnp
from jax import lax
from jax.experimental import pallas as pl
from jax.experimental.pallas import tpu as pltpu


# ------------------------------ fused kernel ---------------------------------

def _fused_cnn_kernel(x_ref, w1_ref, w2_ref, w3_ref, w4_ref,
                      sb1_ref, sb2_ref, sb3_ref, sb4_ref, o_ref,
                      *, W, Cin):
    """All four Conv+BN+ReLU layers for one batch element, channels-major.

    x_ref  : (1, Cin, M)      flattened H*W grid on lanes (M = H*W, e.g. 256)
    w1_ref : (64, 4*Cin)      layer-1 weights, column = (tap, cin)
    w2_ref : (64, 256)        layer-2 weights, column = (tap, cin)
    w3_ref : (32, 64)   w4_ref: (16, 32)
    sb*_ref: (Cout, 2)        col 0 = scale, col 1 = bias (conv bias + BN folded)
    o_ref  : (1, 16, M)       final activations, channels-major (lane-dense)
    """
    M = x_ref.shape[-1]
    offsets = (0, 1, W, W + 1)          # 2x2 taps on the row-major r = h*W + w grid

    x = x_ref[0]                         # (Cin, M)

    # ---- layer 1: Conv2d(Cin, 64, 2) + BN + ReLU as VPU broadcast-FMAs ----
    w1 = w1_ref[...]
    y1 = None
    for t, off in enumerate(offsets):
        xs = x if off == 0 else pltpu.roll(x, shift=(M - off) % M, axis=1)
        for ci in range(Cin):
            col = w1[:, t * Cin + ci:t * Cin + ci + 1]      # (64, 1)
            term = col * xs[ci:ci + 1, :]                   # (64, M) outer product
            y1 = term if y1 is None else y1 + term
    y1 = jnp.maximum(y1 * sb1_ref[:, 0:1] + sb1_ref[:, 1:2], 0.0)

    # ---- layer 2: Conv2d(64, 64, 2) + BN + ReLU, single K=256 MXU dot ----
    # Taps are circular lane rolls (XLU); wrapped lanes only hit pruned rows.
    p2 = jnp.concatenate(
        [y1 if off == 0 else pltpu.roll(y1, shift=(M - off) % M, axis=1)
         for off in offsets],
        axis=0)                                              # (256, M)
    y2 = jnp.dot(w2_ref[...], p2, preferred_element_type=jnp.float32)  # (64, M)
    y2 = jnp.maximum(y2 * sb2_ref[:, 0:1] + sb2_ref[:, 1:2], 0.0)

    # ---- layer 3: Conv2d(64, 32, 1) + BN + ReLU ----
    y3 = jnp.dot(w3_ref[...], y2, preferred_element_type=jnp.float32)  # (32, M)
    y3 = jnp.maximum(y3 * sb3_ref[:, 0:1] + sb3_ref[:, 1:2], 0.0)

    # ---- layer 4: Conv2d(32, 16, 1) + BN + ReLU ----
    y4 = jnp.dot(w4_ref[...], y3, preferred_element_type=jnp.float32)  # (16, M)
    y4 = jnp.maximum(y4 * sb4_ref[:, 0:1] + sb4_ref[:, 1:2], 0.0)

    o_ref[0] = y4                                            # lane-dense store


# ------------------------------ model forward --------------------------------

@jax.jit
def cnn_layers_1_forward(x_nchw, kparams):
    """Equivalent of cnn_layers_1.forward (inference). Input NCHW, output NCHW."""
    w1, w2, w3, w4, sb1, sb2, sb3, sb4 = kparams
    N, Cin, H, W = x_nchw.shape
    Ho, Wo = H - 2, W - 2          # spatial size after the two 2x2 VALID convs
    Cout = w4.shape[0]
    M = H * W                      # padded working grid (256 -> lane-aligned)

    # Contiguous reshape only (no transpose / pad / concat in the wrapper).
    x_flat = x_nchw.astype(jnp.float32).reshape(N, Cin, M)

    kernel = functools.partial(_fused_cnn_kernel, W=W, Cin=Cin)
    out = pl.pallas_call(
        kernel,
        out_shape=jax.ShapeDtypeStruct((N, Cout, M), jnp.float32),
        grid=(N,),
        in_specs=[
            pl.BlockSpec((1, Cin, M), lambda n: (n, 0, 0)),
            pl.BlockSpec(w1.shape, lambda n: (0, 0)),
            pl.BlockSpec(w2.shape, lambda n: (0, 0)),
            pl.BlockSpec(w3.shape, lambda n: (0, 0)),
            pl.BlockSpec(w4.shape, lambda n: (0, 0)),
            pl.BlockSpec(sb1.shape, lambda n: (0, 0)),
            pl.BlockSpec(sb2.shape, lambda n: (0, 0)),
            pl.BlockSpec(sb3.shape, lambda n: (0, 0)),
            pl.BlockSpec(sb4.shape, lambda n: (0, 0)),
        ],
        out_specs=pl.BlockSpec((1, Cout, M), lambda n: (n, 0, 0)),
        compiler_params=pltpu.CompilerParams(dimension_semantics=("parallel",)),
    )(x_flat, w1, w2, w3, w4, sb1, sb2, sb3, sb4)

    # (N, 16, H*W) -> NCHW (N, 16, Ho, Wo): drop the padded rows/cols.
    return out.reshape(N, Cout, H, W)[:, :, :Ho, :Wo]


# --------------------------- parameter construction --------------------------

def init_params(key, input_size):
    """Deterministic synthetic params matching cnn_layers_1.__init__ shapes.

    Returns (kernel_params, ref_params):
      kernel_params = (w1, w2, w3, w4, sb1, sb2, sb3, sb4) with w_i prepacked
      channels-major as (Cout, kh*kw*Cin) (column index = tap*Cin + cin) and
      sb_i = stacked (scale, bias) of shape (Cout, 2).
    """
    specs = [
        (input_size, 64, 2),   # Conv2d(input_size, 64, 2) + BN(64)
        (64, 64, 2),           # Conv2d(64, 64, 2)         + BN(64)
        (64, 32, 1),           # Conv2d(64, 32, 1)         + BN(32)
        (32, 16, 1),           # Conv2d(32, 16, 1)         + BN(16)
    ]
    eps = 1e-5  # PyTorch BatchNorm2d default
    ws, sbs, ref_params = [], [], []
    for i, (cin, cout, k) in enumerate(specs):
        kw, kcb, kg, kb, km, kv = jax.random.split(jax.random.fold_in(key, i), 6)
        w_hwio = 0.1 * jax.random.normal(kw, (k, k, cin, cout), jnp.float32)
        conv_b = 0.1 * jax.random.normal(kcb, (cout,), jnp.float32)
        gamma = 1.0 + 0.1 * jax.random.normal(kg, (cout,), jnp.float32)
        beta = 0.1 * jax.random.normal(kb, (cout,), jnp.float32)
        mean = 0.1 * jax.random.normal(km, (cout,), jnp.float32)
        var = jnp.abs(jax.random.normal(kv, (cout,), jnp.float32)) + 0.5
        # Fold conv bias + BatchNorm (inference stats) into per-channel affine.
        scale = gamma / jnp.sqrt(var + eps)
        bias = beta + (conv_b - mean) * scale
        # Channels-major packing: w_cm[co, (ki*k + kj)*cin + ci].
        w_cm = jnp.transpose(w_hwio, (3, 0, 1, 2)).reshape(cout, k * k * cin)
        ws.append(w_cm)
        sbs.append(jnp.stack([scale, bias], axis=1))          # (cout, 2)
        ref_params.append((w_hwio, scale.reshape(1, 1, 1, -1), bias.reshape(1, 1, 1, -1)))
    return tuple(ws) + tuple(sbs), ref_params


# ------------------------------ pure-JAX reference ----------------------------

def reference_forward(x_nchw, ref_params):
    """lax.conv reference for correctness checking (inference semantics)."""
    y = jnp.transpose(x_nchw, (0, 2, 3, 1)).astype(jnp.float32)
    for w_hwio, scale, bias in ref_params:
        y = lax.conv_general_dilated(
            y, w_hwio, window_strides=(1, 1), padding="VALID",
            dimension_numbers=("NHWC", "HWIO", "NHWC"))
        y = jnp.maximum(y * scale + bias, 0.0)
    return jnp.transpose(y, (0, 3, 1, 2))


# ----------------------------------- main -------------------------------------

if __name__ == "__main__":
    key = jax.random.PRNGKey(0)
    k_x, k_p = jax.random.split(key)

    # Shapes consistent with the module: batch=2, input_size=1, 16x16 "image".
    x = jax.random.normal(k_x, (2, 1, 16, 16), jnp.float32)   # NCHW (PyTorch layout)
    kparams, ref_params = init_params(k_p, input_size=1)

    out = jax.block_until_ready(cnn_layers_1_forward(x, kparams))
    assert out.shape == (2, 16, 14, 14), out.shape            # 16x16 -> 15x15 -> 14x14

    ref = reference_forward(x, ref_params)
    max_err = float(jnp.max(jnp.abs(out - ref)))
    assert jnp.allclose(out, ref, rtol=2e-3, atol=2e-3), max_err

    print("KERNEL_OK")
</pallas_src>

<mosaic_0001>
module attributes {stable_mosaic.version = 11 : i64} {
  func.func @_fused_cnn_kernel(%arg0: i32, %arg1: memref<1x1x256xf32, #tpu.memory_space<vmem>>, %arg2: memref<64x4xf32, #tpu.memory_space<vmem>>, %arg3: memref<64x256xf32, #tpu.memory_space<vmem>>, %arg4: memref<32x64xf32, #tpu.memory_space<vmem>>, %arg5: memref<16x32xf32, #tpu.memory_space<vmem>>, %arg6: memref<64x2xf32, #tpu.memory_space<vmem>>, %arg7: memref<64x2xf32, #tpu.memory_space<vmem>>, %arg8: memref<32x2xf32, #tpu.memory_space<vmem>>, %arg9: memref<16x2xf32, #tpu.memory_space<vmem>>, %arg10: memref<1x16x256xf32, #tpu.memory_space<vmem>>) attributes {dimension_semantics = [#tpu.dimension_semantics<parallel>], iteration_bounds = array<i64: 2>, scalar_prefetch = 0 : i64, scratch_operands = 0 : i64, tpu.core_type = #tpu.core_type<tc>, window_params = [{transform_indices = @transform_0, window_bounds = array<i64: 1, 1, 256>}, {pipeline_mode = #tpu.pipeline_mode<synchronous>, transform_indices = @transform_1, window_bounds = array<i64: 64, 4>}, {pipeline_mode = #tpu.pipeline_mode<synchronous>, transform_indices = @transform_2, window_bounds = array<i64: 64, 256>}, {pipeline_mode = #tpu.pipeline_mode<synchronous>, transform_indices = @transform_3, window_bounds = array<i64: 32, 64>}, {pipeline_mode = #tpu.pipeline_mode<synchronous>, transform_indices = @transform_4, window_bounds = array<i64: 16, 32>}, {pipeline_mode = #tpu.pipeline_mode<synchronous>, transform_indices = @transform_5, window_bounds = array<i64: 64, 2>}, {pipeline_mode = #tpu.pipeline_mode<synchronous>, transform_indices = @transform_6, window_bounds = array<i64: 64, 2>}, {pipeline_mode = #tpu.pipeline_mode<synchronous>, transform_indices = @transform_7, window_bounds = array<i64: 32, 2>}, {pipeline_mode = #tpu.pipeline_mode<synchronous>, transform_indices = @transform_8, window_bounds = array<i64: 16, 2>}, {transform_indices = @transform_9, window_bounds = array<i64: 1, 16, 256>}]} {
    %c0 = arith.constant 0 : index
    %c0_0 = arith.constant 0 : index
    %c0_1 = arith.constant 0 : index
    %0 = vector.load %arg1[%c0, %c0_0, %c0_1] : memref<1x1x256xf32, #tpu.memory_space<vmem>>, vector<1x1x256xf32>
    %1 = vector.shape_cast %0 : vector<1x1x256xf32> to vector<1x256xf32>
    %c0_2 = arith.constant 0 : index
    %c0_3 = arith.constant 0 : index
    %2 = vector.load %arg2[%c0_2, %c0_3] : memref<64x4xf32, #tpu.memory_space<vmem>>, vector<64x4xf32>
    %3 = vector.extract_strided_slice %2 {offsets = [0, 0], sizes = [64, 1], strides = [1, 1]} : vector<64x4xf32> to vector<64x1xf32>
    %4 = vector.broadcast %3 : vector<64x1xf32> to vector<64x256xf32>
    %5 = vector.broadcast %1 : vector<1x256xf32> to vector<64x256xf32>
    %6 = arith.mulf %4, %5 : vector<64x256xf32>
    %c255_i32 = arith.constant 255 : i32
    %7 = tpu.dynamic_rotate %1 by %c255_i32 dim 1 : vector<1x256xf32>, i32 -> vector<1x256xf32>
    %8 = vector.extract_strided_slice %2 {offsets = [0, 1], sizes = [64, 1], strides = [1, 1]} : vector<64x4xf32> to vector<64x1xf32>
    %9 = vector.broadcast %8 : vector<64x1xf32> to vector<64x256xf32>
    %10 = vector.broadcast %7 : vector<1x256xf32> to vector<64x256xf32>
    %11 = arith.mulf %9, %10 : vector<64x256xf32>
    %12 = arith.addf %6, %11 : vector<64x256xf32>
    %c240_i32 = arith.constant 240 : i32
    %13 = tpu.dynamic_rotate %1 by %c240_i32 dim 1 : vector<1x256xf32>, i32 -> vector<1x256xf32>
    %14 = vector.extract_strided_slice %2 {offsets = [0, 2], sizes = [64, 1], strides = [1, 1]} : vector<64x4xf32> to vector<64x1xf32>
    %15 = vector.broadcast %14 : vector<64x1xf32> to vector<64x256xf32>
    %16 = vector.broadcast %13 : vector<1x256xf32> to vector<64x256xf32>
    %17 = arith.mulf %15, %16 : vector<64x256xf32>
    %18 = arith.addf %12, %17 : vector<64x256xf32>
    %c239_i32 = arith.constant 239 : i32
    %19 = tpu.dynamic_rotate %1 by %c239_i32 dim 1 : vector<1x256xf32>, i32 -> vector<1x256xf32>
    %20 = vector.extract_strided_slice %2 {offsets = [0, 3], sizes = [64, 1], strides = [1, 1]} : vector<64x4xf32> to vector<64x1xf32>
    %21 = vector.broadcast %20 : vector<64x1xf32> to vector<64x256xf32>
    %22 = vector.broadcast %19 : vector<1x256xf32> to vector<64x256xf32>
    %23 = arith.mulf %21, %22 : vector<64x256xf32>
    %24 = arith.addf %18, %23 : vector<64x256xf32>
    %c0_4 = arith.constant 0 : index
    %c0_5 = arith.constant 0 : index
    %25 = vector.load %arg6[%c0_4, %c0_5] : memref<64x2xf32, #tpu.memory_space<vmem>>, vector<64x1xf32>
    %26 = vector.broadcast %25 : vector<64x1xf32> to vector<64x256xf32>
    %27 = arith.mulf %24, %26 : vector<64x256xf32>
    %c0_6 = arith.constant 0 : index
    %c1 = arith.constant 1 : index
    %28 = vector.load %arg6[%c0_6, %c1] : memref<64x2xf32, #tpu.memory_space<vmem>>, vector<64x1xf32>
    %29 = vector.broadcast %28 : vector<64x1xf32> to vector<64x256xf32>
    %30 = arith.addf %27, %29 : vector<64x256xf32>
    %cst = arith.constant 0.000000e+00 : f32
    %31 = vector.broadcast %cst : f32 to vector<64x256xf32>
    %32 = arith.maximumf %30, %31 : vector<64x256xf32>
    %c255_i32_7 = arith.constant 255 : i32
    %33 = tpu.dynamic_rotate %32 by %c255_i32_7 dim 1 : vector<64x256xf32>, i32 -> vector<64x256xf32>
    %c240_i32_8 = arith.constant 240 : i32
    %34 = tpu.dynamic_rotate %32 by %c240_i32_8 dim 1 : vector<64x256xf32>, i32 -> vector<64x256xf32>
    %c239_i32_9 = arith.constant 239 : i32
    %35 = tpu.dynamic_rotate %32 by %c239_i32_9 dim 1 : vector<64x256xf32>, i32 -> vector<64x256xf32>
    %36 = tpu.concatenate %32, %33, %34, %35 in 0 : vector<64x256xf32>, vector<64x256xf32>, vector<64x256xf32>, vector<64x256xf32> -> vector<256x256xf32>
    %c0_10 = arith.constant 0 : index
    %c0_11 = arith.constant 0 : index
    %37 = vector.load %arg3[%c0_10, %c0_11] : memref<64x256xf32, #tpu.memory_space<vmem>>, vector<64x256xf32>
    %cst_12 = arith.constant dense<0.000000e+00> : vector<64x256xf32>
    %38 = tpu.matmul %37, %36, %cst_12 {dimension_numbers = #tpu.dot_dimension_numbers<[1], [0], [0], [1], [0, 0, 1, 1], [], []>} : vector<64x256xf32>, vector<256x256xf32>, vector<64x256xf32> -> vector<64x256xf32>
    %c0_13 = arith.constant 0 : index
    %c0_14 = arith.constant 0 : index
    %39 = vector.load %arg7[%c0_13, %c0_14] : memref<64x2xf32, #tpu.memory_space<vmem>>, vector<64x1xf32>
    %40 = vector.broadcast %39 : vector<64x1xf32> to vector<64x256xf32>
    %41 = arith.mulf %38, %40 : vector<64x256xf32>
    %c0_15 = arith.constant 0 : index
    %c1_16 = arith.constant 1 : index
    %42 = vector.load %arg7[%c0_15, %c1_16] : memref<64x2xf32, #tpu.memory_space<vmem>>, vector<64x1xf32>
    %43 = vector.broadcast %42 : vector<64x1xf32> to vector<64x256xf32>
    %44 = arith.addf %41, %43 : vector<64x256xf32>
    %cst_17 = arith.constant 0.000000e+00 : f32
    %45 = vector.broadcast %cst_17 : f32 to vector<64x256xf32>
    %46 = arith.maximumf %44, %45 : vector<64x256xf32>
    %c0_18 = arith.constant 0 : index
    %c0_19 = arith.constant 0 : index
    %47 = vector.load %arg4[%c0_18, %c0_19] : memref<32x64xf32, #tpu.memory_space<vmem>>, vector<32x64xf32>
    %cst_20 = arith.constant dense<0.000000e+00> : vector<32x256xf32>
    %48 = tpu.matmul %47, %46, %cst_20 {dimension_numbers = #tpu.dot_dimension_numbers<[1], [0], [0], [1], [0, 0, 1, 1], [], []>} : vector<32x64xf32>, vector<64x256xf32>, vector<32x256xf32> -> vector<32x256xf32>
    %c0_21 = arith.constant 0 : index
    %c0_22 = arith.constant 0 : index
    %49 = vector.load %arg8[%c0_21, %c0_22] : memref<32x2xf32, #tpu.memory_space<vmem>>, vector<32x1xf32>
    %50 = vector.broadcast %49 : vector<32x1xf32> to vector<32x256xf32>
    %51 = arith.mulf %48, %50 : vector<32x256xf32>
    %c0_23 = arith.constant 0 : index
    %c1_24 = arith.constant 1 : index
    %52 = vector.load %arg8[%c0_23, %c1_24] : memref<32x2xf32, #tpu.memory_space<vmem>>, vector<32x1xf32>
    %53 = vector.broadcast %52 : vector<32x1xf32> to vector<32x256xf32>
    %54 = arith.addf %51, %53 : vector<32x256xf32>
    %cst_25 = arith.constant 0.000000e+00 : f32
    %55 = vector.broadcast %cst_25 : f32 to vector<32x256xf32>
    %56 = arith.maximumf %54, %55 : vector<32x256xf32>
    %c0_26 = arith.constant 0 : index
    %c0_27 = arith.constant 0 : index
    %57 = vector.load %arg5[%c0_26, %c0_27] : memref<16x32xf32, #tpu.memory_space<vmem>>, vector<16x32xf32>
    %cst_28 = arith.constant dense<0.000000e+00> : vector<16x256xf32>
    %58 = tpu.matmul %57, %56, %cst_28 {dimension_numbers = #tpu.dot_dimension_numbers<[1], [0], [0], [1], [0, 0, 1, 1], [], []>} : vector<16x32xf32>, vector<32x256xf32>, vector<16x256xf32> -> vector<16x256xf32>
    %c0_29 = arith.constant 0 : index
    %c0_30 = arith.constant 0 : index
    %59 = vector.load %arg9[%c0_29, %c0_30] : memref<16x2xf32, #tpu.memory_space<vmem>>, vector<16x1xf32>
    %60 = vector.broadcast %59 : vector<16x1xf32> to vector<16x256xf32>
    %61 = arith.mulf %58, %60 : vector<16x256xf32>
    %c0_31 = arith.constant 0 : index
    %c1_32 = arith.constant 1 : index
    %62 = vector.load %arg9[%c0_31, %c1_32] : memref<16x2xf32, #tpu.memory_space<vmem>>, vector<16x1xf32>
    %63 = vector.broadcast %62 : vector<16x1xf32> to vector<16x256xf32>
    %64 = arith.addf %61, %63 : vector<16x256xf32>
    %cst_33 = arith.constant 0.000000e+00 : f32
    %65 = vector.broadcast %cst_33 : f32 to vector<16x256xf32>
    %66 = arith.maximumf %64, %65 : vector<16x256xf32>
    %c0_34 = arith.constant 0 : index
    %c0_35 = arith.constant 0 : index
    %c0_36 = arith.constant 0 : index
    %67 = vector.load %arg10[%c0_34, %c0_35, %c0_36] : memref<1x16x256xf32, #tpu.memory_space<vmem>>, vector<1x16x256xf32>
    %68 = vector.shape_cast %67 : vector<1x16x256xf32> to vector<16x256xf32>
    %69 = vector.shape_cast %66 : vector<16x256xf32> to vector<1x16x256xf32>
    tpu.vector_store %arg10[%c0_34, %c0_35, %c0_36], %69 {strides = array<i32>} : memref<1x16x256xf32, #tpu.memory_space<vmem>>, vector<1x16x256xf32>,
    return
  }
  func.func @transform_0(%arg0: i32) -> (i32, i32, i32) {
    %c0_i32 = arith.constant 0 : i32
    %c0_i32_0 = arith.constant 0 : i32
    %c0_i32_1 = arith.constant 0 : i32
    return %arg0, %c0_i32, %c0_i32_0 : i32, i32, i32
  }
  func.func @transform_1(%arg0: i32) -> (i32, i32) {
    %c0_i32 = arith.constant 0 : i32
    %c0_i32_0 = arith.constant 0 : i32
    %c0_i32_1 = arith.constant 0 : i32
    return %c0_i32, %c0_i32_0 : i32, i32
  }
  func.func @transform_2(%arg0: i32) -> (i32, i32) {
    %c0_i32 = arith.constant 0 : i32
    %c0_i32_0 = arith.constant 0 : i32
    %c0_i32_1 = arith.constant 0 : i32
    return %c0_i32, %c0_i32_0 : i32, i32
  }
  func.func @transform_3(%arg0: i32) -> (i32, i32) {
    %c0_i32 = arith.constant 0 : i32
    %c0_i32_0 = arith.constant 0 : i32
    %c0_i32_1 = arith.constant 0 : i32
    return %c0_i32, %c0_i32_0 : i32, i32
  }
  func.func @transform_4(%arg0: i32) -> (i32, i32) {
    %c0_i32 = arith.constant 0 : i32
    %c0_i32_0 = arith.constant 0 : i32
    %c0_i32_1 = arith.constant 0 : i32
    return %c0_i32, %c0_i32_0 : i32, i32
  }
  func.func @transform_5(%arg0: i32) -> (i32, i32) {
    %c0_i32 = arith.constant 0 : i32
    %c0_i32_0 = arith.constant 0 : i32
    %c0_i32_1 = arith.constant 0 : i32
    return %c0_i32, %c0_i32_0 : i32, i32
  }
  func.func @transform_6(%arg0: i32) -> (i32, i32) {
    %c0_i32 = arith.constant 0 : i32
    %c0_i32_0 = arith.constant 0 : i32
    %c0_i32_1 = arith.constant 0 : i32
    return %c0_i32, %c0_i32_0 : i32, i32
  }
  func.func @transform_7(%arg0: i32) -> (i32, i32) {
    %c0_i32 = arith.constant 0 : i32
    %c0_i32_0 = arith.constant 0 : i32
    %c0_i32_1 = arith.constant 0 : i32
    return %c0_i32, %c0_i32_0 : i32, i32
  }
  func.func @transform_8(%arg0: i32) -> (i32, i32) {
    %c0_i32 = arith.constant 0 : i32
    %c0_i32_0 = arith.constant 0 : i32
    %c0_i32_1 = arith.constant 0 : i32
    return %c0_i32, %c0_i32_0 : i32, i32
  }
  func.func @transform_9(%arg0: i32) -> (i32, i32, i32) {
    %c0_i32 = arith.constant 0 : i32
    %c0_i32_0 = arith.constant 0 : i32
    %c0_i32_1 = arith.constant 0 : i32
    return %arg0, %c0_i32, %c0_i32_0 : i32, i32, i32
  }
}

</mosaic_0001>

<llo_original>
// kernel: cnn_layers_1_forward.1
$region0: #{cnn_layers_1_forward.1}
  #allocation0 [shape = 'u32[]', space=smem, size = 0x4, offset = 0x4, fixed_abs, tag = 'smem constant byte address 0x4 - core index']
  #allocation1 [shape = 'u32[144,128]{1,0:T(1,128)}', space=vmem, size = 0x12000, scoped, tag = 'internal scratch']
  %s0 = inlined_call_operand.vmem [shape: f32[2,1,256], index: 0, kind: input, shape index: {}]
  %s1 = inlined_call_operand.vmem [shape: f32[64,4], index: 1, kind: input, shape index: {}]
  %s2 = inlined_call_operand.vmem [shape: f32[64,256], index: 2, kind: input, shape index: {}]
  %s3 = inlined_call_operand.vmem [shape: f32[32,64], index: 3, kind: input, shape index: {}]
  %s4 = inlined_call_operand.vmem [shape: f32[16,32], index: 4, kind: input, shape index: {}]
  %s5 = inlined_call_operand.vmem [shape: f32[64,2], index: 5, kind: input, shape index: {}]
  %s6 = inlined_call_operand.vmem [shape: f32[64,2], index: 6, kind: input, shape index: {}]
  %s7 = inlined_call_operand.vmem [shape: f32[32,2], index: 7, kind: input, shape index: {}]
  %s8 = inlined_call_operand.vmem [shape: f32[16,2], index: 8, kind: input, shape index: {}]
  %s9 = inlined_call_operand.vmem [shape: f32[2,16,256], index: 9, kind: output, shape index: {}]
  %s10 = sld [smem:[#allocation0]]
  $region69: #{cnn_layers_1_forward.1} parent=0
    _
  %s12 = ssub.s32 1, %s10
  %s13 = scalar_select 0, %s12, %s10
  loop: start=0, step=1, limit=4
  $region2: #{cnn_layers_1_forward.1} parent=0 // loop_pre_header
    _
  $region3: #{cnn_layers_1_forward.1} parent=0 // loop_header
    %s15 = sphi 0, %s19
    %p16 = scmp.ge.s32.totalorder %s15, 4
    %s25 = sphi 0, %s27
    %s28 = sphi 0, %s25
    %s29 = sphi 0, %s28
    %s45 = sphi 0, %s29
    %s49 = sphi 0, %s49
    %s51 = sphi 0, %s49
    %s52 = sphi 0, %s51
    %s66 = sphi 0, %s52
    %s70 = sphi 0, %s70
    %s72 = sphi 0, %s70
    %s73 = sphi 0, %s72
    %s87 = sphi 0, %s73
    %s91 = sphi 0, %s91
    %s93 = sphi 0, %s91
    %s94 = sphi 0, %s93
    %s108 = sphi 0, %s94
    %s112 = sphi 0, %s112
    %s114 = sphi 0, %s112
    %s115 = sphi 0, %s114
    %s129 = sphi 0, %s115
    %s133 = sphi 0, %s133
    %s135 = sphi 0, %s133
    %s136 = sphi 0, %s135
    %s150 = sphi 0, %s136
    %s154 = sphi 0, %s154
    %s156 = sphi 0, %s154
    %s157 = sphi 0, %s156
    %s171 = sphi 0, %s157
    %s175 = sphi 0, %s175
    %s177 = sphi 0, %s175
    %s178 = sphi 0, %s177
    %s192 = sphi 0, %s178
    %s196 = sphi 0, %s196
    %s198 = sphi 0, %s196
    %s199 = sphi 0, %s198
    %s213 = sphi 0, %s199
    %s219 = sphi 0, %s221
    %s222 = sphi 0, %s219
    %s223 = sphi 0, %s222
    %s239 = sphi 0, %s223
  $region4: #{cnn_layers_1_forward.1} parent=0 // loop_header_branch
    %18 = sbr.rel (%p16) target = $region8
  $region5: #{cnn_layers_1_forward.1} parent=0 // loop_body
    %s20 = ssub.s32 %s15, 1
    %s21 = ssub.s32 %s15, 2
    %s22 = sadd.s32 %s15, 1
    %s23 = ssub.s32 %s15, %s22
    %p24 = scmp.eq.s32.totalorder %s23, 0
    %s26 = sadd.s32 %s25, 1
    %s27 = scalar_select %p24, %s25, %s26
    %p30 = pneg %p24
    %p31 = scmp.eq.s32.totalorder %s15, 1
    %p32 = por %p30, %p31
    %p33 = scmp.ne.s32.totalorder %s25, %s28
    %p34 = scmp.eq.s32.totalorder %s15, 0
    %p35 = por %p33, %p34
    %p36 = scmp.ne.s32.totalorder %s25, %s28
    %p37 = scmp.eq.s32.totalorder %s20, 1
    %p38 = por %p36, %p37
    %p39 = scmp.ne.s32.totalorder %s28, %s29
    %p40 = scmp.eq.s32.totalorder %s20, 0
    %p41 = por %p39, %p40
    %p42 = scmp.ne.s32.totalorder %s28, %s29
    %p43 = scmp.eq.s32.totalorder %s21, 1
    %p44 = por %p42, %p43
    %p46 = scmp.ne.s32.totalorder %s29, %s45
    %p47 = scmp.eq.s32.totalorder %s21, 0
    %p48 = por %p46, %p47
    %s50 = sadd.s32 %s49, 1
    %p53 = scmp.eq.s32.totalorder %s15, 1
    %p54 = scmp.ne.s32.totalorder %s49, %s51
    %p55 = scmp.eq.s32.totalorder %s15, 0
    %p56 = por %p54, %p55
    %p57 = scmp.ne.s32.totalorder %s49, %s51
    %p58 = scmp.eq.s32.totalorder %s20, 1
    %p59 = por %p57, %p58
    %p60 = scmp.ne.s32.totalorder %s51, %s52
    %p61 = scmp.eq.s32.totalorder %s20, 0
    %p62 = por %p60, %p61
    %p63 = scmp.ne.s32.totalorder %s51, %s52
    %p64 = scmp.eq.s32.totalorder %s21, 1
    %p65 = por %p63, %p64
    %p67 = scmp.ne.s32.totalorder %s52, %s66
    %p68 = scmp.eq.s32.totalorder %s21, 0
    %p69 = por %p67, %p68
    %s71 = sadd.s32 %s70, 1
    %p74 = scmp.eq.s32.totalorder %s15, 1
    %p75 = scmp.ne.s32.totalorder %s70, %s72
    %p76 = scmp.eq.s32.totalorder %s15, 0
    %p77 = por %p75, %p76
    %p78 = scmp.ne.s32.totalorder %s70, %s72
    %p79 = scmp.eq.s32.totalorder %s20, 1
    %p80 = por %p78, %p79
    %p81 = scmp.ne.s32.totalorder %s72, %s73
    %p82 = scmp.eq.s32.totalorder %s20, 0
    %p83 = por %p81, %p82
    %p84 = scmp.ne.s32.totalorder %s72, %s73
    %p85 = scmp.eq.s32.totalorder %s21, 1
    %p86 = por %p84, %p85
    %p88 = scmp.ne.s32.totalorder %s73, %s87
    %p89 = scmp.eq.s32.totalorder %s21, 0
    %p90 = por %p88, %p89
    %s92 = sadd.s32 %s91, 1
    %p95 = scmp.eq.s32.totalorder %s15, 1
    %p96 = scmp.ne.s32.totalorder %s91, %s93
    %p97 = scmp.eq.s32.totalorder %s15, 0
    %p98 = por %p96, %p97
    %p99 = scmp.ne.s32.totalorder %s91, %s93
    %p100 = scmp.eq.s32.totalorder %s20, 1
    %p101 = por %p99, %p100
    %p102 = scmp.ne.s32.totalorder %s93, %s94
    %p103 = scmp.eq.s32.totalorder %s20, 0
    %p104 = por %p102, %p103
    %p105 = scmp.ne.s32.totalorder %s93, %s94
    %p106 = scmp.eq.s32.totalorder %s21, 1
    %p107 = por %p105, %p106
    %p109 = scmp.ne.s32.totalorder %s94, %s108
    %p110 = scmp.eq.s32.totalorder %s21, 0
    %p111 = por %p109, %p110
    %s113 = sadd.s32 %s112, 1
    %p116 = scmp.eq.s32.totalorder %s15, 1
    %p117 = scmp.ne.s32.totalorder %s112, %s114
    %p118 = scmp.eq.s32.totalorder %s15, 0
    %p119 = por %p117, %p118
    %p120 = scmp.ne.s32.totalorder %s112, %s114
    %p121 = scmp.eq.s32.totalorder %s20, 1
    %p122 = por %p120, %p121
    %p123 = scmp.ne.s32.totalorder %s114, %s115
    %p124 = scmp.eq.s32.totalorder %s20, 0
    %p125 = por %p123, %p124
    %p126 = scmp.ne.s32.totalorder %s114, %s115
    %p127 = scmp.eq.s32.totalorder %s21, 1
    %p128 = por %p126, %p127
    %p130 = scmp.ne.s32.totalorder %s115, %s129
    %p131 = scmp.eq.s32.totalorder %s21, 0
    %p132 = por %p130, %p131
    %s134 = sadd.s32 %s133, 1
    %p137 = scmp.eq.s32.totalorder %s15, 1
    %p138 = scmp.ne.s32.totalorder %s133, %s135
    %p139 = scmp.eq.s32.totalorder %s15, 0
    %p140 = por %p138, %p139
    %p141 = scmp.ne.s32.totalorder %s133, %s135
    %p142 = scmp.eq.s32.totalorder %s20, 1
    %p143 = por %p141, %p142
    %p144 = scmp.ne.s32.totalorder %s135, %s136
    %p145 = scmp.eq.s32.totalorder %s20, 0
    %p146 = por %p144, %p145
    %p147 = scmp.ne.s32.totalorder %s135, %s136
    %p148 = scmp.eq.s32.totalorder %s21, 1
    %p149 = por %p147, %p148
    %p151 = scmp.ne.s32.totalorder %s136, %s150
    %p152 = scmp.eq.s32.totalorder %s21, 0
    %p153 = por %p151, %p152
    %s155 = sadd.s32 %s154, 1
    %p158 = scmp.eq.s32.totalorder %s15, 1
    %p159 = scmp.ne.s32.totalorder %s154, %s156
    %p160 = scmp.eq.s32.totalorder %s15, 0
    %p161 = por %p159, %p160
    %p162 = scmp.ne.s32.totalorder %s154, %s156
    %p163 = scmp.eq.s32.totalorder %s20, 1
    %p164 = por %p162, %p163
    %p165 = scmp.ne.s32.totalorder %s156, %s157
    %p166 = scmp.eq.s32.totalorder %s20, 0
    %p167 = por %p165, %p166
    %p168 = scmp.ne.s32.totalorder %s156, %s157
    %p169 = scmp.eq.s32.totalorder %s21, 1
    %p170 = por %p168, %p169
    %p172 = scmp.ne.s32.totalorder %s157, %s171
    %p173 = scmp.eq.s32.totalorder %s21, 0
    %p174 = por %p172, %p173
    %s176 = sadd.s32 %s175, 1
    %p179 = scmp.eq.s32.totalorder %s15, 1
    %p180 = scmp.ne.s32.totalorder %s175, %s177
    %p181 = scmp.eq.s32.totalorder %s15, 0
    %p182 = por %p180, %p181
    %p183 = scmp.ne.s32.totalorder %s175, %s177
    %p184 = scmp.eq.s32.totalorder %s20, 1
    %p185 = por %p183, %p184
    %p186 = scmp.ne.s32.totalorder %s177, %s178
    %p187 = scmp.eq.s32.totalorder %s20, 0
    %p188 = por %p186, %p187
    %p189 = scmp.ne.s32.totalorder %s177, %s178
    %p190 = scmp.eq.s32.totalorder %s21, 1
    %p191 = por %p189, %p190
    %p193 = scmp.ne.s32.totalorder %s178, %s192
    %p194 = scmp.eq.s32.totalorder %s21, 0
    %p195 = por %p193, %p194
    %s197 = sadd.s32 %s196, 1
    %p200 = scmp.eq.s32.totalorder %s15, 1
    %p201 = scmp.ne.s32.totalorder %s196, %s198
    %p202 = scmp.eq.s32.totalorder %s15, 0
    %p203 = por %p201, %p202
    %p204 = scmp.ne.s32.totalorder %s196, %s198
    %p205 = scmp.eq.s32.totalorder %s20, 1
    %p206 = por %p204, %p205
    %p207 = scmp.ne.s32.totalorder %s198, %s199
    %p208 = scmp.eq.s32.totalorder %s20, 0
    %p209 = por %p207, %p208
    %p210 = scmp.ne.s32.totalorder %s198, %s199
    %p211 = scmp.eq.s32.totalorder %s21, 1
    %p212 = por %p210, %p211
    %p214 = scmp.ne.s32.totalorder %s199, %s213
    %p215 = scmp.eq.s32.totalorder %s21, 0
    %p216 = por %p214, %p215
    %s217 = ssub.s32 %s15, %s22
    %p218 = scmp.eq.s32.totalorder %s217, 0
    %s220 = sadd.s32 %s219, 1
    %s221 = scalar_select %p218, %s219, %s220
    %p224 = pneg %p218
    %p225 = scmp.eq.s32.totalorder %s15, 1
    %p226 = por %p224, %p225
    %p227 = scmp.ne.s32.totalorder %s219, %s222
    %p228 = scmp.eq.s32.totalorder %s15, 0
    %p229 = por %p227, %p228
    %p230 = scmp.ne.s32.totalorder %s219, %s222
    %p231 = scmp.eq.s32.totalorder %s20, 1
    %p232 = por %p230, %p231
    %p233 = scmp.ne.s32.totalorder %s222, %s223
    %p234 = scmp.eq.s32.totalorder %s20, 0
    %p235 = por %p233, %p234
    %p236 = scmp.ne.s32.totalorder %s222, %s223
    %p237 = scmp.eq.s32.totalorder %s21, 1
    %p238 = por %p236, %p237
    %p240 = scmp.ne.s32.totalorder %s223, %s239
    %p241 = scmp.eq.s32.totalorder %s21, 0
    %p242 = por %p240, %p241
    %p243 = scmp.le.s32.totalorder 1, %s15
    %p244 = scmp.lt.s32.totalorder %s15, 3
    %p245 = pnand %p243, %p244
    %p246 = pneg %p245
    // Predicated region
    $region9: #{cnn_layers_1_forward.1} parent=5 // pred_check
      _
    $region10: #{cnn_layers_1_forward.1} parent=5 // pred_check_branch
      %248 = sbr.rel (%p245) target = $region12
    $region11: #{cnn_layers_1_forward.1} parent=5 // pred_region
      %s249 = ssub.s32 %s15, 1
      // Predicated region
      $region13: #{cnn_layers_1_forward.1} parent=11 // pred_check
        %p250 = pneg %p62
      $region14: #{cnn_layers_1_forward.1} parent=11 // pred_check_branch
        %252 = sbr.rel (%p250) target = $region16
      $region15: #{cnn_layers_1_forward.1} parent=11 // pred_region
        _
      $region16: #{cnn_layers_1_forward.1} parent=11 // pred_fallthru
        _
      // Predicated region
      $region17: #{cnn_layers_1_forward.1} parent=11 // pred_check
        %p253 = pneg %p83
      $region18: #{cnn_layers_1_forward.1} parent=11 // pred_check_branch
        %255 = sbr.rel (%p253) target = $region20
      $region19: #{cnn_layers_1_forward.1} parent=11 // pred_region
        _
      $region20: #{cnn_layers_1_forward.1} parent=11 // pred_fallthru
        _
      // Predicated region
      $region21: #{cnn_layers_1_forward.1} parent=11 // pred_check
        %p256 = pneg %p104
      $region22: #{cnn_layers_1_forward.1} parent=11 // pred_check_branch
        %258 = sbr.rel (%p256) target = $region24
      $region23: #{cnn_layers_1_forward.1} parent=11 // pred_region
        _
      $region24: #{cnn_layers_1_forward.1} parent=11 // pred_fallthru
        _
      // Predicated region
      $region25: #{cnn_layers_1_forward.1} parent=11 // pred_check
        %p259 = pneg %p125
      $region26: #{cnn_layers_1_forward.1} parent=11 // pred_check_branch
        %261 = sbr.rel (%p259) target = $region28
      $region27: #{cnn_layers_1_forward.1} parent=11 // pred_region
        _
      $region28: #{cnn_layers_1_forward.1} parent=11 // pred_fallthru
        _
      // Predicated region
      $region29: #{cnn_layers_1_forward.1} parent=11 // pred_check
        %p262 = pneg %p146
      $region30: #{cnn_layers_1_forward.1} parent=11 // pred_check_branch
        %264 = sbr.rel (%p262) target = $region32
      $region31: #{cnn_layers_1_forward.1} parent=11 // pred_region
        _
      $region32: #{cnn_layers_1_forward.1} parent=11 // pred_fallthru
        _
      // Predicated region
      $region33: #{cnn_layers_1_forward.1} parent=11 // pred_check
        %p265 = pneg %p167
      $region34: #{cnn_layers_1_forward.1} parent=11 // pred_check_branch
        %267 = sbr.rel (%p265) target = $region36
      $region35: #{cnn_layers_1_forward.1} parent=11 // pred_region
        _
      $region36: #{cnn_layers_1_forward.1} parent=11 // pred_fallthru
        _
      // Predicated region
      $region37: #{cnn_layers_1_forward.1} parent=11 // pred_check
        %p268 = pneg %p188
      $region38: #{cnn_layers_1_forward.1} parent=11 // pred_check_branch
        %270 = sbr.rel (%p268) target = $region40
      $region39: #{cnn_layers_1_forward.1} parent=11 // pred_region
        _
      $region40: #{cnn_layers_1_forward.1} parent=11 // pred_fallthru
        _
      // Predicated region
      $region41: #{cnn_layers_1_forward.1} parent=11 // pred_check
        %p271 = pneg %p209
      $region42: #{cnn_layers_1_forward.1} parent=11 // pred_check_branch
        %273 = sbr.rel (%p271) target = $region44
      $region43: #{cnn_layers_1_forward.1} parent=11 // pred_region
        _
      $region44: #{cnn_layers_1_forward.1} parent=11 // pred_fallthru
        _
    $region12: #{cnn_layers_1_forward.1} parent=5 // pred_fallthru
      _
    %p274 = scmp.lt.s32.totalorder %s15, 2
    // Predicated region
    $region45: #{cnn_layers_1_forward.1} parent=5 // pred_check
      %p275 = pneg %p274
    $region46: #{cnn_layers_1_forward.1} parent=5 // pred_check_branch
      %277 = sbr.rel (%p275) target = $region48
    $region47: #{cnn_layers_1_forward.1} parent=5 // pred_region
      // Predicated region
      $region49: #{cnn_layers_1_forward.1} parent=47 // pred_check
        %p278 = pneg %p35
      $region50: #{cnn_layers_1_forward.1} parent=47 // pred_check_branch
        %280 = sbr.rel (%p278) target = $region52
      $region51: #{cnn_layers_1_forward.1} parent=47 // pred_region
        %p281 = scmp.lt.s32.totalorder %s15, 1
        %s282 = scalar_select %p281, %s15, 1
        %s283 = smul.addr %s282, 2
        %s284 = scalar_lea.vmem %s0, %s283
      $region52: #{cnn_layers_1_forward.1} parent=47 // pred_fallthru
        _
    $region48: #{cnn_layers_1_forward.1} parent=5 // pred_fallthru
      _
    %p285 = scmp.le.s32.totalorder 1, %s15
    %p286 = scmp.lt.s32.totalorder %s15, 3
    %p287 = pnand %p285, %p286
    %p288 = pneg %p287
    // Predicated region
    $region53: #{cnn_layers_1_forward.1} parent=5 // pred_check
      _
    $region54: #{cnn_layers_1_forward.1} parent=5 // pred_check_branch
      %290 = sbr.rel (%p287) target = $region56
    $region55: #{cnn_layers_1_forward.1} parent=5 // pred_region
      %s291 = ssub.s32 %s15, 1
      %p292 = scmp.lt.s32.totalorder %s20, 1
      %s293 = scalar_select %p292, %s20, 1
      %s294 = smul.addr %s293, 2
      %s295 = scalar_lea.vmem %s0, %s294
      %p296 = pneg %p41
      %p297 = pneg %p38
      %p298 = pneg %p62
      %p299 = pneg %p59
      %p300 = pneg %p83
      %p301 = pneg %p80
      %p302 = pneg %p104
      %p303 = pneg %p101
      %p304 = pneg %p125
      %p305 = pneg %p122
      %p306 = pneg %p146
      %p307 = pneg %p143
      %p308 = pneg %p167
      %p309 = pneg %p164
      %p310 = pneg %p188
      %p311 = pneg %p185
      %p312 = pneg %p209
      %p313 = pneg %p206
      %p314 = pneg %p235
      %p315 = pneg %p232
      %p316 = scmp.lt.s32.totalorder %s20, 1
      %s317 = scalar_select %p316, %s20, 1
      %s318 = smul.addr %s317, 4
      %s319 = smul.addr %s318, 8
      %s320 = scalar_lea.vmem %s9, %s319
      %p321 = scmp.lt.s32.totalorder %s20, 1
      %s322 = scalar_select %p321, %s20, 1
      %s323 = smul.addr %s322, 2
      %s324 = scalar_lea.vmem %s0, %s323
      %p325 = scmp.lt.s32.totalorder %s20, 1
      %s326 = scalar_select %p325, %s20, 1
      %s327 = smul.addr %s326, 4
      %s328 = smul.addr %s327, 8
      %s329 = scalar_lea.vmem %s9, %s328
      %v330 = vld [vmem:[%s324] sm:$0x3]
      %v331 = vld [vmem:[%s1] sm:$0xff]
      %v332 = vld [vmem:[%s1 + $0x8] sm:$0xff]
      %v333 = vld [vmem:[%s1 + $0x10] sm:$0xff]
      %v334 = vld [vmem:[%s1 + $0x18] sm:$0xff]
      %v335 = vld [vmem:[%s1 + $0x20] sm:$0xff]
      %v336 = vld [vmem:[%s1 + $0x28] sm:$0xff]
      %v337 = vld [vmem:[%s1 + $0x30] sm:$0xff]
      %v338 = vld [vmem:[%s1 + $0x38] sm:$0xff]
      %340 = vset.pattern.permute.xlu0 0
      %341 = vperm.xlu0 %340, %v331
      %v342 = vpop.permute.xlu0 %341
      %345 = vset.pattern.permute.xlu0 0
      %346 = vperm.xlu0 %345, %v332
      %v347 = vpop.permute.xlu0 %346
      %350 = vset.pattern.permute.xlu0 0
      %351 = vperm.xlu0 %350, %v333
      %v352 = vpop.permute.xlu0 %351
      %355 = vset.pattern.permute.xlu0 0
      %356 = vperm.xlu0 %355, %v334
      %v357 = vpop.permute.xlu0 %356
      %360 = vset.pattern.permute.xlu0 0
      %361 = vperm.xlu0 %360, %v335
      %v362 = vpop.permute.xlu0 %361
      %365 = vset.pattern.permute.xlu0 0
      %366 = vperm.xlu0 %365, %v336
      %v367 = vpop.permute.xlu0 %366
      %370 = vset.pattern.permute.xlu0 0
      %371 = vperm.xlu0 %370, %v337
      %v372 = vpop.permute.xlu0 %371
      %375 = vset.pattern.permute.xlu0 0
      %376 = vperm.xlu0 %375, %v338
      %v377 = vpop.permute.xlu0 %376
      %v380 = vlaneseq
      %v381 = vshrl.u32 %v380, 7
      %v382 = vsub.s32 0, %v381
      %v383 = vrot.slane %v330, %v382
      %v384 = vlaneseq
      %v385 = vshrl.u32 %v384, 7
      %v386 = vsub.s32 1, %v385
      %v387 = vrot.slane %v330, %v386
      %v390 = vmul.f32 %v342, %v383
      %v391 = vmul.f32 %v342, %v387
      %v392 = vmul.f32 %v347, %v383
      %v393 = vmul.f32 %v347, %v387
      %v394 = vmul.f32 %v352, %v383
      %v395 = vmul.f32 %v352, %v387
      %v396 = vmul.f32 %v357, %v383
      %v397 = vmul.f32 %v357, %v387
      %v398 = vmul.f32 %v362, %v383
      %v399 = vmul.f32 %v362, %v387
      %v400 = vmul.f32 %v367, %v383
      %v401 = vmul.f32 %v367, %v387
      %v402 = vmul.f32 %v372, %v383
      %v403 = vmul.f32 %v372, %v387
      %v404 = vmul.f32 %v377, %v383
      %v405 = vmul.f32 %v377, %v387
      %406 = vrot.lane.b32.xlu0 %v383, 127
      %v407 = vpop.permute.xlu0 %406
      %408 = vrot.lane.b32.xlu0 %v387, 127
      %v409 = vpop.permute.xlu0 %408
      %v410 = vlaneseq
      %v411 = vand.u32 %v410, 127
      %vm412 = vcmp.lt.s32.totalorder %v411, 127
      %v413 = vsel %vm412, %v407, %v409
      %v414 = vsel %vm412, %v409, %v407
      %415 = vset.pattern.permute.xlu0 1
      %416 = vperm.xlu0 %415, %v331
      %v417 = vpop.permute.xlu0 %416
      %419 = vset.pattern.permute.xlu0 1
      %420 = vperm.xlu0 %419, %v332
      %v421 = vpop.permute.xlu0 %420
      %423 = vset.pattern.permute.xlu0 1
      %424 = vperm.xlu0 %423, %v333
      %v425 = vpop.permute.xlu0 %424
      %427 = vset.pattern.permute.xlu0 1
      %428 = vperm.xlu0 %427, %v334
      %v429 = vpop.permute.xlu0 %428
      %431 = vset.pattern.permute.xlu0 1
      %432 = vperm.xlu0 %431, %v335
      %v433 = vpop.permute.xlu0 %432
      %435 = vset.pattern.permute.xlu0 1
      %436 = vperm.xlu0 %435, %v336
      %v437 = vpop.permute.xlu0 %436
      %439 = vset.pattern.permute.xlu0 1
      %440 = vperm.xlu0 %439, %v337
      %v441 = vpop.permute.xlu0 %440
      %443 = vset.pattern.permute.xlu0 1
      %444 = vperm.xlu0 %443, %v338
      %v445 = vpop.permute.xlu0 %444
      %v447 = vlaneseq
      %v448 = vshrl.u32 %v447, 7
      %v449 = vsub.s32 0, %v448
      %v450 = vrot.slane %v413, %v449
      %v451 = vlaneseq
      %v452 = vshrl.u32 %v451, 7
      %v453 = vsub.s32 0, %v452
      %v454 = vrot.slane %v414, %v453
      %v455 = vmul.f32 %v417, %v450
      %v456 = vmul.f32 %v417, %v454
      %v457 = vmul.f32 %v421, %v450
      %v458 = vmul.f32 %v421, %v454
      %v459 = vmul.f32 %v425, %v450
      %v460 = vmul.f32 %v425, %v454
      %v461 = vmul.f32 %v429, %v450
      %v462 = vmul.f32 %v429, %v454
      %v463 = vmul.f32 %v433, %v450
      %v464 = vmul.f32 %v433, %v454
      %v465 = vmul.f32 %v437, %v450
      %v466 = vmul.f32 %v437, %v454
      %v467 = vmul.f32 %v441, %v450
      %v468 = vmul.f32 %v441, %v454
      %v469 = vmul.f32 %v445, %v450
      %v470 = vmul.f32 %v445, %v454
      %v471 = vadd.f32 %v390, %v455
      %v472 = vadd.f32 %v391, %v456
      %v473 = vadd.f32 %v392, %v457
      %v474 = vadd.f32 %v393, %v458
      %v475 = vadd.f32 %v394, %v459
      %v476 = vadd.f32 %v395, %v460
      %v477 = vadd.f32 %v396, %v461
      %v478 = vadd.f32 %v397, %v462
      %v479 = vadd.f32 %v398, %v463
      %v480 = vadd.f32 %v399, %v464
      %v481 = vadd.f32 %v400, %v465
      %v482 = vadd.f32 %v401, %v466
      %v483 = vadd.f32 %v402, %v467
      %v484 = vadd.f32 %v403, %v468
      %v485 = vadd.f32 %v404, %v469
      %v486 = vadd.f32 %v405, %v470
      %487 = vrot.lane.b32.xlu0 %v383, 112
      %v488 = vpop.permute.xlu0 %487
      %489 = vrot.lane.b32.xlu0 %v387, 112
      %v490 = vpop.permute.xlu0 %489
      %vm491 = vcmp.lt.s32.totalorder %v411, 112
      %v492 = vsel %vm491, %v488, %v490
      %v493 = vsel %vm491, %v490, %v488
      %494 = vset.pattern.permute.xlu0 2
      %495 = vperm.xlu0 %494, %v331
      %v496 = vpop.permute.xlu0 %495
      %498 = vset.pattern.permute.xlu0 2
      %499 = vperm.xlu0 %498, %v332
      %v500 = vpop.permute.xlu0 %499
      %502 = vset.pattern.permute.xlu0 2
      %503 = vperm.xlu0 %502, %v333
      %v504 = vpop.permute.xlu0 %503
      %506 = vset.pattern.permute.xlu0 2
      %507 = vperm.xlu0 %506, %v334
      %v508 = vpop.permute.xlu0 %507
      %510 = vset.pattern.permute.xlu0 2
      %511 = vperm.xlu0 %510, %v335
      %v512 = vpop.permute.xlu0 %511
      %514 = vset.pattern.permute.xlu0 2
      %515 = vperm.xlu0 %514, %v336
      %v516 = vpop.permute.xlu0 %515
      %518 = vset.pattern.permute.xlu0 2
      %519 = vperm.xlu0 %518, %v337
      %v520 = vpop.permute.xlu0 %519
      %522 = vset.pattern.permute.xlu0 2
      %523 = vperm.xlu0 %522, %v338
      %v524 = vpop.permute.xlu0 %523
      %v526 = vlaneseq
      %v527 = vshrl.u32 %v526, 7
      %v528 = vsub.s32 0, %v527
      %v529 = vrot.slane %v492, %v528
      %v530 = vlaneseq
      %v531 = vshrl.u32 %v530, 7
      %v532 = vsub.s32 0, %v531
      %v533 = vrot.slane %v493, %v532
      %v534 = vmul.f32 %v496, %v529
      %v535 = vmul.f32 %v496, %v533
      %v536 = vmul.f32 %v500, %v529
      %v537 = vmul.f32 %v500, %v533
      %v538 = vmul.f32 %v504, %v529
      %v539 = vmul.f32 %v504, %v533
      %v540 = vmul.f32 %v508, %v529
      %v541 = vmul.f32 %v508, %v533
      %v542 = vmul.f32 %v512, %v529
      %v543 = vmul.f32 %v512, %v533
      %v544 = vmul.f32 %v516, %v529
      %v545 = vmul.f32 %v516, %v533
      %v546 = vmul.f32 %v520, %v529
      %v547 = vmul.f32 %v520, %v533
      %v548 = vmul.f32 %v524, %v529
      %v549 = vmul.f32 %v524, %v533
      %v550 = vadd.f32 %v471, %v534
      %v551 = vadd.f32 %v472, %v535
      %v552 = vadd.f32 %v473, %v536
      %v553 = vadd.f32 %v474, %v537
      %v554 = vadd.f32 %v475, %v538
      %v555 = vadd.f32 %v476, %v539
      %v556 = vadd.f32 %v477, %v540
      %v557 = vadd.f32 %v478, %v541
      %v558 = vadd.f32 %v479, %v542
      %v559 = vadd.f32 %v480, %v543
      %v560 = vadd.f32 %v481, %v544
      %v561 = vadd.f32 %v482, %v545
      %v562 = vadd.f32 %v483, %v546
      %v563 = vadd.f32 %v484, %v547
      %v564 = vadd.f32 %v485, %v548
      %v565 = vadd.f32 %v486, %v549
      %566 = vrot.lane.b32.xlu0 %v383, 111
      %v567 = vpop.permute.xlu0 %566
      %568 = vrot.lane.b32.xlu0 %v387, 111
      %v569 = vpop.permute.xlu0 %568
      %vm570 = vcmp.lt.s32.totalorder %v411, 111
      %v571 = vsel %vm570, %v567, %v569
      %v572 = vsel %vm570, %v569, %v567
      %573 = vset.pattern.permute.xlu0 3
      %574 = vperm.xlu0 %573, %v331
      %v575 = vpop.permute.xlu0 %574
      %577 = vset.pattern.permute.xlu0 3
      %578 = vperm.xlu0 %577, %v332
      %v579 = vpop.permute.xlu0 %578
      %581 = vset.pattern.permute.xlu0 3
      %582 = vperm.xlu0 %581, %v333
      %v583 = vpop.permute.xlu0 %582
      %585 = vset.pattern.permute.xlu0 3
      %586 = vperm.xlu0 %585, %v334
      %v587 = vpop.permute.xlu0 %586
      %589 = vset.pattern.permute.xlu0 3
      %590 = vperm.xlu0 %589, %v335
      %v591 = vpop.permute.xlu0 %590
      %593 = vset.pattern.permute.xlu0 3
      %594 = vperm.xlu0 %593, %v336
      %v595 = vpop.permute.xlu0 %594
      %597 = vset.pattern.permute.xlu0 3
      %598 = vperm.xlu0 %597, %v337
      %v599 = vpop.permute.xlu0 %598
      %601 = vset.pattern.permute.xlu0 3
      %602 = vperm.xlu0 %601, %v338
      %v603 = vpop.permute.xlu0 %602
      %v605 = vlaneseq
      %v606 = vshrl.u32 %v605, 7
      %v607 = vsub.s32 0, %v606
      %v608 = vrot.slane %v571, %v607
      %v609 = vlaneseq
      %v610 = vshrl.u32 %v609, 7
      %v611 = vsub.s32 0, %v610
      %v612 = vrot.slane %v572, %v611
      %v613 = vmul.f32 %v575, %v608
      %v614 = vmul.f32 %v575, %v612
      %v615 = vmul.f32 %v579, %v608
      %v616 = vmul.f32 %v579, %v612
      %v617 = vmul.f32 %v583, %v608
      %v618 = vmul.f32 %v583, %v612
      %v619 = vmul.f32 %v587, %v608
      %v620 = vmul.f32 %v587, %v612
      %v621 = vmul.f32 %v591, %v608
      %v622 = vmul.f32 %v591, %v612
      %v623 = vmul.f32 %v595, %v608
      %v624 = vmul.f32 %v595, %v612
      %v625 = vmul.f32 %v599, %v608
      %v626 = vmul.f32 %v599, %v612
      %v627 = vmul.f32 %v603, %v608
      %v628 = vmul.f32 %v603, %v612
      %v629 = vadd.f32 %v550, %v613
      %v630 = vadd.f32 %v551, %v614
      %v631 = vadd.f32 %v552, %v615
      %v632 = vadd.f32 %v553, %v616
      %v633 = vadd.f32 %v554, %v617
      %v634 = vadd.f32 %v555, %v618
      %v635 = vadd.f32 %v556, %v619
      %v636 = vadd.f32 %v557, %v620
      %v637 = vadd.f32 %v558, %v621
      %v638 = vadd.f32 %v559, %v622
      %v639 = vadd.f32 %v560, %v623
      %v640 = vadd.f32 %v561, %v624
      %v641 = vadd.f32 %v562, %v625
      %v642 = vadd.f32 %v563, %v626
      %v643 = vadd.f32 %v564, %v627
      %v644 = vadd.f32 %v565, %v628
      %v645 = vld [vmem:[%s5] sm:$0xff]
      %v646 = vld [vmem:[%s5 + $0x8] sm:$0xff]
      %v647 = vld [vmem:[%s5 + $0x10] sm:$0xff]
      %v648 = vld [vmem:[%s5 + $0x18] sm:$0xff]
      %v649 = vld [vmem:[%s5 + $0x20] sm:$0xff]
      %v650 = vld [vmem:[%s5 + $0x28] sm:$0xff]
      %v651 = vld [vmem:[%s5 + $0x30] sm:$0xff]
      %v652 = vld [vmem:[%s5 + $0x38] sm:$0xff]
      %654 = vset.pattern.permute.xlu0 0
      %655 = vperm.xlu0 %654, %v645
      %v656 = vpop.permute.xlu0 %655
      %659 = vset.pattern.permute.xlu0 0
      %660 = vperm.xlu0 %659, %v646
      %v661 = vpop.permute.xlu0 %660
      %664 = vset.pattern.permute.xlu0 0
      %665 = vperm.xlu0 %664, %v647
      %v666 = vpop.permute.xlu0 %665
      %669 = vset.pattern.permute.xlu0 0
      %670 = vperm.xlu0 %669, %v648
      %v671 = vpop.permute.xlu0 %670
      %674 = vset.pattern.permute.xlu0 0
      %675 = vperm.xlu0 %674, %v649
      %v676 = vpop.permute.xlu0 %675
      %679 = vset.pattern.permute.xlu0 0
      %680 = vperm.xlu0 %679, %v650
      %v681 = vpop.permute.xlu0 %680
      %684 = vset.pattern.permute.xlu0 0
      %685 = vperm.xlu0 %684, %v651
      %v686 = vpop.permute.xlu0 %685
      %689 = vset.pattern.permute.xlu0 0
      %690 = vperm.xlu0 %689, %v652
      %v691 = vpop.permute.xlu0 %690
      %v693 = vmul.f32 %v629, %v656
      %v694 = vmul.f32 %v630, %v656
      %v695 = vmul.f32 %v631, %v661
      %v696 = vmul.f32 %v632, %v661
      %v697 = vmul.f32 %v633, %v666
      %v698 = vmul.f32 %v634, %v666
      %v699 = vmul.f32 %v635, %v671
      %v700 = vmul.f32 %v636, %v671
      %v701 = vmul.f32 %v637, %v676
      %v702 = vmul.f32 %v638, %v676
      %v703 = vmul.f32 %v639, %v681
      %v704 = vmul.f32 %v640, %v681
      %v705 = vmul.f32 %v641, %v686
      %v706 = vmul.f32 %v642, %v686
      %v707 = vmul.f32 %v643, %v691
      %v708 = vmul.f32 %v644, %v691
      %709 = vset.pattern.permute.xlu0 1
      %710 = vperm.xlu0 %709, %v645
      %v711 = vpop.permute.xlu0 %710
      %713 = vset.pattern.permute.xlu0 1
      %714 = vperm.xlu0 %713, %v646
      %v715 = vpop.permute.xlu0 %714
      %717 = vset.pattern.permute.xlu0 1
      %718 = vperm.xlu0 %717, %v647
      %v719 = vpop.permute.xlu0 %718
      %721 = vset.pattern.permute.xlu0 1
      %722 = vperm.xlu0 %721, %v648
      %v723 = vpop.permute.xlu0 %722
      %725 = vset.pattern.permute.xlu0 1
      %726 = vperm.xlu0 %725, %v649
      %v727 = vpop.permute.xlu0 %726
      %729 = vset.pattern.permute.xlu0 1
      %730 = vperm.xlu0 %729, %v650
      %v731 = vpop.permute.xlu0 %730
      %733 = vset.pattern.permute.xlu0 1
      %734 = vperm.xlu0 %733, %v651
      %v735 = vpop.permute.xlu0 %734
      %737 = vset.pattern.permute.xlu0 1
      %738 = vperm.xlu0 %737, %v652
      %v739 = vpop.permute.xlu0 %738
      %v741 = vadd.f32 %v693, %v711
      %v742 = vadd.f32 %v694, %v711
      %v743 = vadd.f32 %v695, %v715
      %v744 = vadd.f32 %v696, %v715
      %v745 = vadd.f32 %v697, %v719
      %v746 = vadd.f32 %v698, %v719
      %v747 = vadd.f32 %v699, %v723
      %v748 = vadd.f32 %v700, %v723
      %v749 = vadd.f32 %v701, %v727
      %v750 = vadd.f32 %v702, %v727
      %v751 = vadd.f32 %v703, %v731
      %v752 = vadd.f32 %v704, %v731
      %v753 = vadd.f32 %v705, %v735
      %v754 = vadd.f32 %v706, %v735
      %v755 = vadd.f32 %v707, %v739
      %v756 = vadd.f32 %v708, %v739
      %v757 = vmax.f32 %v741, 0.0
      %v758 = vmax.f32 %v742, 0.0
      %v759 = vmax.f32 %v743, 0.0
      %v760 = vmax.f32 %v744, 0.0
      %v761 = vmax.f32 %v745, 0.0
      %v762 = vmax.f32 %v746, 0.0
      %v763 = vmax.f32 %v747, 0.0
      %v764 = vmax.f32 %v748, 0.0
      %v765 = vmax.f32 %v749, 0.0
      %v766 = vmax.f32 %v750, 0.0
      %v767 = vmax.f32 %v751, 0.0
      %v768 = vmax.f32 %v752, 0.0
      %v769 = vmax.f32 %v753, 0.0
      %v770 = vmax.f32 %v754, 0.0
      %v771 = vmax.f32 %v755, 0.0
      %v772 = vmax.f32 %v756, 0.0
      %773 = vrot.lane.b32.xlu0 %v757, 127
      %v774 = vpop.permute.xlu0 %773
      %775 = vrot.lane.b32.xlu0 %v759, 127
      %v776 = vpop.permute.xlu0 %775
      %777 = vrot.lane.b32.xlu0 %v761, 127
      %v778 = vpop.permute.xlu0 %777
      %779 = vrot.lane.b32.xlu0 %v763, 127
      %v780 = vpop.permute.xlu0 %779
      %781 = vrot.lane.b32.xlu0 %v765, 127
      %v782 = vpop.permute.xlu0 %781
      %783 = vrot.lane.b32.xlu0 %v767, 127
      %v784 = vpop.permute.xlu0 %783
      %785 = vrot.lane.b32.xlu0 %v769, 127
      %v786 = vpop.permute.xlu0 %785
      %787 = vrot.lane.b32.xlu0 %v771, 127
      %v788 = vpop.permute.xlu0 %787
      %789 = vrot.lane.b32.xlu0 %v758, 127
      %v790 = vpop.permute.xlu0 %789
      %791 = vrot.lane.b32.xlu0 %v760, 127
      %v792 = vpop.permute.xlu0 %791
      %793 = vrot.lane.b32.xlu0 %v762, 127
      %v794 = vpop.permute.xlu0 %793
      %795 = vrot.lane.b32.xlu0 %v764, 127
      %v796 = vpop.permute.xlu0 %795
      %797 = vrot.lane.b32.xlu0 %v766, 127
      %v798 = vpop.permute.xlu0 %797
      %799 = vrot.lane.b32.xlu0 %v768, 127
      %v800 = vpop.permute.xlu0 %799
      %801 = vrot.lane.b32.xlu0 %v770, 127
      %v802 = vpop.permute.xlu0 %801
      %803 = vrot.lane.b32.xlu0 %v772, 127
      %v804 = vpop.permute.xlu0 %803
      %v805 = vsel %vm412, %v774, %v790
      %v806 = vsel %vm412, %v776, %v792
      %v807 = vsel %vm412, %v778, %v794
      %v808 = vsel %vm412, %v780, %v796
      %v809 = vsel %vm412, %v782, %v798
      %v810 = vsel %vm412, %v784, %v800
      %v811 = vsel %vm412, %v786, %v802
      %v812 = vsel %vm412, %v788, %v804
      %v813 = vsel %vm412, %v790, %v774
      %v814 = vsel %vm412, %v792, %v776
      %v815 = vsel %vm412, %v794, %v778
      %v816 = vsel %vm412, %v796, %v780
      %v817 = vsel %vm412, %v798, %v782
      %v818 = vsel %vm412, %v800, %v784
      %v819 = vsel %vm412, %v802, %v786
      %v820 = vsel %vm412, %v804, %v788
      %821 = vrot.lane.b32.xlu0 %v757, 112
      %v822 = vpop.permute.xlu0 %821
      %823 = vrot.lane.b32.xlu0 %v759, 112
      %v824 = vpop.permute.xlu0 %823
      %825 = vrot.lane.b32.xlu0 %v761, 112
      %v826 = vpop.permute.xlu0 %825
      %827 = vrot.lane.b32.xlu0 %v763, 112
      %v828 = vpop.permute.xlu0 %827
      %829 = vrot.lane.b32.xlu0 %v765, 112
      %v830 = vpop.permute.xlu0 %829
      %831 = vrot.lane.b32.xlu0 %v767, 112
      %v832 = vpop.permute.xlu0 %831
      %833 = vrot.lane.b32.xlu0 %v769, 112
      %v834 = vpop.permute.xlu0 %833
      %835 = vrot.lane.b32.xlu0 %v771, 112
      %v836 = vpop.permute.xlu0 %835
      %837 = vrot.lane.b32.xlu0 %v758, 112
      %v838 = vpop.permute.xlu0 %837
      %839 = vrot.lane.b32.xlu0 %v760, 112
      %v840 = vpop.permute.xlu0 %839
      %841 = vrot.lane.b32.xlu0 %v762, 112
      %v842 = vpop.permute.xlu0 %841
      %843 = vrot.lane.b32.xlu0 %v764, 112
      %v844 = vpop.permute.xlu0 %843
      %845 = vrot.lane.b32.xlu0 %v766, 112
      %v846 = vpop.permute.xlu0 %845
      %847 = vrot.lane.b32.xlu0 %v768, 112
      %v848 = vpop.permute.xlu0 %847
      %849 = vrot.lane.b32.xlu0 %v770, 112
      %v850 = vpop.permute.xlu0 %849
      %851 = vrot.lane.b32.xlu0 %v772, 112
      %v852 = vpop.permute.xlu0 %851
      %v853 = vsel %vm491, %v822, %v838
      %v854 = vsel %vm491, %v824, %v840
      %v855 = vsel %vm491, %v826, %v842
      %v856 = vsel %vm491, %v828, %v844
      %v857 = vsel %vm491, %v830, %v846
      %v858 = vsel %vm491, %v832, %v848
      %v859 = vsel %vm491, %v834, %v850
      %v860 = vsel %vm491, %v836, %v852
      %v861 = vsel %vm491, %v838, %v822
      %v862 = vsel %vm491, %v840, %v824
      %v863 = vsel %vm491, %v842, %v826
      %v864 = vsel %vm491, %v844, %v828
      %v865 = vsel %vm491, %v846, %v830
      %v866 = vsel %vm491, %v848, %v832
      %v867 = vsel %vm491, %v850, %v834
      %v868 = vsel %vm491, %v852, %v836
      %869 = vrot.lane.b32.xlu0 %v757, 111
      %v870 = vpop.permute.xlu0 %869
      %871 = vrot.lane.b32.xlu0 %v759, 111
      %v872 = vpop.permute.xlu0 %871
      %873 = vrot.lane.b32.xlu0 %v761, 111
      %v874 = vpop.permute.xlu0 %873
      %875 = vrot.lane.b32.xlu0 %v763, 111
      %v876 = vpop.permute.xlu0 %875
      %877 = vrot.lane.b32.xlu0 %v765, 111
      %v878 = vpop.permute.xlu0 %877
      %879 = vrot.lane.b32.xlu0 %v767, 111
      %v880 = vpop.permute.xlu0 %879
      %881 = vrot.lane.b32.xlu0 %v769, 111
      %v882 = vpop.permute.xlu0 %881
      %883 = vrot.lane.b32.xlu0 %v771, 111
      %v884 = vpop.permute.xlu0 %883
      %885 = vrot.lane.b32.xlu0 %v758, 111
      %v886 = vpop.permute.xlu0 %885
      %887 = vrot.lane.b32.xlu0 %v760, 111
      %v888 = vpop.permute.xlu0 %887
      %889 = vrot.lane.b32.xlu0 %v762, 111
      %v890 = vpop.permute.xlu0 %889
      %891 = vrot.lane.b32.xlu0 %v764, 111
      %v892 = vpop.permute.xlu0 %891
      %893 = vrot.lane.b32.xlu0 %v766, 111
      %v894 = vpop.permute.xlu0 %893
      %895 = vrot.lane.b32.xlu0 %v768, 111
      %v896 = vpop.permute.xlu0 %895
      %897 = vrot.lane.b32.xlu0 %v770, 111
      %v898 = vpop.permute.xlu0 %897
      %899 = vrot.lane.b32.xlu0 %v772, 111
      %v900 = vpop.permute.xlu0 %899
      %v901 = vsel %vm570, %v870, %v886
      %v902 = vsel %vm570, %v872, %v888
      %v903 = vsel %vm570, %v874, %v890
      %v904 = vsel %vm570, %v876, %v892
      %v905 = vsel %vm570, %v878, %v894
      %v906 = vsel %vm570, %v880, %v896
      %v907 = vsel %vm570, %v882, %v898
      %v908 = vsel %vm570, %v884, %v900
      %v909 = vsel %vm570, %v886, %v870
      %v910 = vsel %vm570, %v888, %v872
      %v911 = vsel %vm570, %v890, %v874
      %v912 = vsel %vm570, %v892, %v876
      %v913 = vsel %vm570, %v894, %v878
      %v914 = vsel %vm570, %v896, %v880
      %v915 = vsel %vm570, %v898, %v882
      %v916 = vsel %vm570, %v900, %v884
      %v917 = vld [vmem:[%s2] sm:$0xff]
      %v918 = vld [vmem:[%s2 + $0x8] sm:$0xff]
      %v919 = vld [vmem:[%s2 + $0x10] sm:$0xff]
      %v920 = vld [vmem:[%s2 + $0x18] sm:$0xff]
      %v921 = vld [vmem:[%s2 + $0x20] sm:$0xff]
      %v922 = vld [vmem:[%s2 + $0x28] sm:$0xff]
      %v923 = vld [vmem:[%s2 + $0x30] sm:$0xff]
      %v924 = vld [vmem:[%s2 + $0x38] sm:$0xff]
      %v925 = vld [vmem:[%s2 + $0x40] sm:$0xff]
      %v926 = vld [vmem:[%s2 + $0x48] sm:$0xff]
      %v927 = vld [vmem:[%s2 + $0x50] sm:$0xff]
      %v928 = vld [vmem:[%s2 + $0x58] sm:$0xff]
      %v929 = vld [vmem:[%s2 + $0x60] sm:$0xff]
      %v930 = vld [vmem:[%s2 + $0x68] sm:$0xff]
      %v931 = vld [vmem:[%s2 + $0x70] sm:$0xff]
      %v932 = vld [vmem:[%s2 + $0x78] sm:$0xff]
      %933 = vmatprep.subr.mxu0 %v758
      %934 = vmatpush1.msra.mxu0 %v757
      %935 = vmatprep.subr.mxu0 %v760
      %936 = vmatpush1.msra.mxu0 %v759
      %937 = vmatprep.subr.mxu0 %v762
      %938 = vmatpush1.msra.mxu0 %v761
      %939 = vmatprep.subr.mxu0 %v764
      %940 = vmatpush1.msra.mxu0 %v763
      %941 = vmatprep.subr.mxu0 %v766
      %942 = vmatpush1.msra.mxu0 %v765
      %943 = vmatprep.subr.mxu0 %v768
      %944 = vmatpush1.msra.mxu0 %v767
      %945 = vmatprep.subr.mxu0 %v770
      %946 = vmatpush1.msra.mxu0 %v769
      %947 = vmatprep.subr.mxu0 %v772
      %948 = vmatpush1.msra.mxu0 %v771
      %949 = vmatprep.subr.mxu0 %v813
      %950 = vmatpush1.msra.mxu0 %v805
      %951 = vmatprep.subr.mxu0 %v814
      %952 = vmatpush1.msra.mxu0 %v806
      %953 = vmatprep.subr.mxu0 %v815
      %954 = vmatpush1.msra.mxu0 %v807
      %955 = vmatprep.subr.mxu0 %v816
      %956 = vmatpush1.msra.mxu0 %v808
      %957 = vmatprep.subr.mxu0 %v817
      %958 = vmatpush1.msra.mxu0 %v809
      %959 = vmatprep.subr.mxu0 %v818
      %960 = vmatpush1.msra.mxu0 %v810
      %961 = vmatprep.subr.mxu0 %v819
      %962 = vmatpush1.msra.mxu0 %v811
      %963 = vmatprep.subr.mxu0 %v820
      %964 = vmatpush1.msra.mxu0 %v812
      %965 = vmatprep.subr.mxu0 %v861
      %966 = vmatpush1.msra.mxu0 %v853
      %967 = vmatprep.subr.mxu0 %v862
      %968 = vmatpush1.msra.mxu0 %v854
      %969 = vmatprep.subr.mxu0 %v863
      %970 = vmatpush1.msra.mxu0 %v855
      %971 = vmatprep.subr.mxu0 %v864
      %972 = vmatpush1.msra.mxu0 %v856
      %973 = vmatprep.subr.mxu0 %v865
      %974 = vmatpush1.msra.mxu0 %v857
      %975 = vmatprep.subr.mxu0 %v866
      %976 = vmatpush1.msra.mxu0 %v858
      %977 = vmatprep.subr.mxu0 %v867
      %978 = vmatpush1.msra.mxu0 %v859
      %979 = vmatprep.subr.mxu0 %v868
      %980 = vmatpush1.msra.mxu0 %v860
      %981 = vmatprep.subr.mxu0 %v909
      %982 = vmatpush1.msra.mxu0 %v901
      %983 = vmatprep.subr.mxu0 %v910
      %984 = vmatpush1.msra.mxu0 %v902
      %985 = vmatprep.subr.mxu0 %v911
      %986 = vmatpush1.msra.mxu0 %v903
      %987 = vmatprep.subr.mxu0 %v912
      %988 = vmatpush1.msra.mxu0 %v904
      %989 = vmatprep.subr.mxu0 %v913
      %990 = vmatpush1.msra.mxu0 %v905
      %991 = vmatprep.subr.mxu0 %v914
      %992 = vmatpush1.msra.mxu0 %v906
      %993 = vmatprep.subr.mxu0 %v915
      %994 = vmatpush1.msra.mxu0 %v907
      %995 = vmatprep.subr.mxu0 %v916
      %996 = vmatpush1.msra.mxu0 %v908
      %997 = vmatprep.mubr.f32.mxu0 %v918
      %998 = vmatmul.mubr.f32.gmra.mrb[0].mxu0 %v917
      %v999 = vpop.f32.mrb[0].mxu0
      %v1000 = vadd.f32 0.0, %v999
      %v1001 = vpop.f32.mrb[0].mxu0
      %v1002 = vadd.f32 0.0, %v1001
      %1003 = vmatprep.mubr.f32.mxu0 %v920
      %1004 = vmatmul.mubr.f32.gmra.mrb[0].mxu0 %v919
      %v1005 = vpop.f32.mrb[0].mxu0
      %v1006 = vadd.f32 0.0, %v1005
      %v1007 = vpop.f32.mrb[0].mxu0
      %v1008 = vadd.f32 0.0, %v1007
      %1009 = vmatprep.mubr.f32.mxu0 %v922
      %1010 = vmatmul.mubr.f32.gmra.mrb[0].mxu0 %v921
      %v1011 = vpop.f32.mrb[0].mxu0
      %v1012 = vadd.f32 0.0, %v1011
      %v1013 = vpop.f32.mrb[0].mxu0
      %v1014 = vadd.f32 0.0, %v1013
      %1015 = vmatprep.mubr.f32.mxu0 %v924
      %1016 = vmatmul.mubr.f32.gmra.mrb[0].mxu0 %v923
      %v1017 = vpop.f32.mrb[0].mxu0
      %v1018 = vadd.f32 0.0, %v1017
      %v1019 = vpop.f32.mrb[0].mxu0
      %v1020 = vadd.f32 0.0, %v1019
      %1021 = vmatprep.mubr.f32.mxu0 %v926
      %1022 = vmatmul.mubr.f32.gmra.mrb[0].mxu0 %v925
      %v1023 = vpop.f32.mrb[0].mxu0
      %v1024 = vadd.f32 0.0, %v1023
      %v1025 = vpop.f32.mrb[0].mxu0
      %v1026 = vadd.f32 0.0, %v1025
      %1027 = vmatprep.mubr.f32.mxu0 %v928
      %1028 = vmatmul.mubr.f32.gmra.mrb[0].mxu0 %v927
      %v1029 = vpop.f32.mrb[0].mxu0
      %v1030 = vadd.f32 0.0, %v1029
      %v1031 = vpop.f32.mrb[0].mxu0
      %v1032 = vadd.f32 0.0, %v1031
      %1033 = vmatprep.mubr.f32.mxu0 %v930
      %1034 = vmatmul.mubr.f32.gmra.mrb[0].mxu0 %v929
      %v1035 = vpop.f32.mrb[0].mxu0
      %v1036 = vadd.f32 0.0, %v1035
      %v1037 = vpop.f32.mrb[0].mxu0
      %v1038 = vadd.f32 0.0, %v1037
      %1039 = vmatprep.mubr.f32.mxu0 %v932
      %1040 = vmatmul.mubr.f32.gmra.mrb[0].mxu0 %v931
      %v1041 = vpop.f32.mrb[0].mxu0
      %v1042 = vadd.f32 0.0, %v1041
      %v1043 = vpop.f32.mrb[0].mxu0
      %v1044 = vadd.f32 0.0, %v1043
      %1045 = vdwg.mxu0
      %v1046 = vld [vmem:[%s6] sm:$0xff]
      %v1047 = vld [vmem:[%s6 + $0x8] sm:$0xff]
      %v1048 = vld [vmem:[%s6 + $0x10] sm:$0xff]
      %v1049 = vld [vmem:[%s6 + $0x18] sm:$0xff]
      %v1050 = vld [vmem:[%s6 + $0x20] sm:$0xff]
      %v1051 = vld [vmem:[%s6 + $0x28] sm:$0xff]
      %v1052 = vld [vmem:[%s6 + $0x30] sm:$0xff]
      %v1053 = vld [vmem:[%s6 + $0x38] sm:$0xff]
      %1055 = vset.pattern.permute.xlu0 0
      %1056 = vperm.xlu0 %1055, %v1046
      %v1057 = vpop.permute.xlu0 %1056
      %1060 = vset.pattern.permute.xlu0 0
      %1061 = vperm.xlu0 %1060, %v1047
      %v1062 = vpop.permute.xlu0 %1061
      %1065 = vset.pattern.permute.xlu0 0
      %1066 = vperm.xlu0 %1065, %v1048
      %v1067 = vpop.permute.xlu0 %1066
      %1070 = vset.pattern.permute.xlu0 0
      %1071 = vperm.xlu0 %1070, %v1049
      %v1072 = vpop.permute.xlu0 %1071
      %1075 = vset.pattern.permute.xlu0 0
      %1076 = vperm.xlu0 %1075, %v1050
      %v1077 = vpop.permute.xlu0 %1076
      %1080 = vset.pattern.permute.xlu0 0
      %1081 = vperm.xlu0 %1080, %v1051
      %v1082 = vpop.permute.xlu0 %1081
      %1085 = vset.pattern.permute.xlu0 0
      %1086 = vperm.xlu0 %1085, %v1052
      %v1087 = vpop.permute.xlu0 %1086
      %1090 = vset.pattern.permute.xlu0 0
      %1091 = vperm.xlu0 %1090, %v1053
      %v1092 = vpop.permute.xlu0 %1091
      %v1094 = vmul.f32 %v1000, %v1057
      %v1095 = vmul.f32 %v1002, %v1057
      %v1096 = vmul.f32 %v1006, %v1062
      %v1097 = vmul.f32 %v1008, %v1062
      %v1098 = vmul.f32 %v1012, %v1067
      %v1099 = vmul.f32 %v1014, %v1067
      %v1100 = vmul.f32 %v1018, %v1072
      %v1101 = vmul.f32 %v1020, %v1072
      %v1102 = vmul.f32 %v1024, %v1077
      %v1103 = vmul.f32 %v1026, %v1077
      %v1104 = vmul.f32 %v1030, %v1082
      %v1105 = vmul.f32 %v1032, %v1082
      %v1106 = vmul.f32 %v1036, %v1087
      %v1107 = vmul.f32 %v1038, %v1087
      %v1108 = vmul.f32 %v1042, %v1092
      %v1109 = vmul.f32 %v1044, %v1092
      %1110 = vset.pattern.permute.xlu0 1
      %1111 = vperm.xlu0 %1110, %v1046
      %v1112 = vpop.permute.xlu0 %1111
      %1114 = vset.pattern.permute.xlu0 1
      %1115 = vperm.xlu0 %1114, %v1047
      %v1116 = vpop.permute.xlu0 %1115
      %1118 = vset.pattern.permute.xlu0 1
      %1119 = vperm.xlu0 %1118, %v1048
      %v1120 = vpop.permute.xlu0 %1119
      %1122 = vset.pattern.permute.xlu0 1
      %1123 = vperm.xlu0 %1122, %v1049
      %v1124 = vpop.permute.xlu0 %1123
      %1126 = vset.pattern.permute.xlu0 1
      %1127 = vperm.xlu0 %1126, %v1050
      %v1128 = vpop.permute.xlu0 %1127
      %1130 = vset.pattern.permute.xlu0 1
      %1131 = vperm.xlu0 %1130, %v1051
      %v1132 = vpop.permute.xlu0 %1131
      %1134 = vset.pattern.permute.xlu0 1
      %1135 = vperm.xlu0 %1134, %v1052
      %v1136 = vpop.permute.xlu0 %1135
      %1138 = vset.pattern.permute.xlu0 1
      %1139 = vperm.xlu0 %1138, %v1053
      %v1140 = vpop.permute.xlu0 %1139
      %v1142 = vadd.f32 %v1094, %v1112
      %v1143 = vadd.f32 %v1095, %v1112
      %v1144 = vadd.f32 %v1096, %v1116
      %v1145 = vadd.f32 %v1097, %v1116
      %v1146 = vadd.f32 %v1098, %v1120
      %v1147 = vadd.f32 %v1099, %v1120
      %v1148 = vadd.f32 %v1100, %v1124
      %v1149 = vadd.f32 %v1101, %v1124
      %v1150 = vadd.f32 %v1102, %v1128
      %v1151 = vadd.f32 %v1103, %v1128
      %v1152 = vadd.f32 %v1104, %v1132
      %v1153 = vadd.f32 %v1105, %v1132
      %v1154 = vadd.f32 %v1106, %v1136
      %v1155 = vadd.f32 %v1107, %v1136
      %v1156 = vadd.f32 %v1108, %v1140
      %v1157 = vadd.f32 %v1109, %v1140
      %v1158 = vmax.f32 %v1142, 0.0
      %v1159 = vmax.f32 %v1143, 0.0
      %v1160 = vmax.f32 %v1144, 0.0
      %v1161 = vmax.f32 %v1145, 0.0
      %v1162 = vmax.f32 %v1146, 0.0
      %v1163 = vmax.f32 %v1147, 0.0
      %v1164 = vmax.f32 %v1148, 0.0
      %v1165 = vmax.f32 %v1149, 0.0
      %v1166 = vmax.f32 %v1150, 0.0
      %v1167 = vmax.f32 %v1151, 0.0
      %v1168 = vmax.f32 %v1152, 0.0
      %v1169 = vmax.f32 %v1153, 0.0
      %v1170 = vmax.f32 %v1154, 0.0
      %v1171 = vmax.f32 %v1155, 0.0
      %v1172 = vmax.f32 %v1156, 0.0
      %v1173 = vmax.f32 %v1157, 0.0
      %v1174 = vld [vmem:[%s3] sm:$0xff]
      %v1175 = vld [vmem:[%s3 + $0x8] sm:$0xff]
      %v1176 = vld [vmem:[%s3 + $0x10] sm:$0xff]
      %v1177 = vld [vmem:[%s3 + $0x18] sm:$0xff]
      %vm1178 = vcmask 523264
      %v1180 = vsel %vm1178, %v1174, 0
      %v1183 = vsel %vm1178, %v1175, 0
      %v1186 = vsel %vm1178, %v1176, 0
      %v1189 = vsel %vm1178, %v1177, 0
      %1191 = vmatprep.subr.mxu0 %v1159
      %1192 = vmatpush1.msra.mxu0 %v1158
      %1193 = vmatprep.subr.mxu0 %v1161
      %1194 = vmatpush1.msra.mxu0 %v1160
      %1195 = vmatprep.subr.mxu0 %v1163
      %1196 = vmatpush1.msra.mxu0 %v1162
      %1197 = vmatprep.subr.mxu0 %v1165
      %1198 = vmatpush1.msra.mxu0 %v1164
      %1199 = vmatprep.subr.mxu0 %v1167
      %1200 = vmatpush1.msra.mxu0 %v1166
      %1201 = vmatprep.subr.mxu0 %v1169
      %1202 = vmatpush1.msra.mxu0 %v1168
      %1203 = vmatprep.subr.mxu0 %v1171
      %1204 = vmatpush1.msra.mxu0 %v1170
      %1205 = vmatprep.subr.mxu0 %v1173
      %1206 = vmatpush1.msra.mxu0 %v1172
      %1207 = vmatprep.subr.mxu0 0.0
      %1208 = vmatpush1.msra.mxu0 0.0
      %1209 = vmatprep.subr.mxu0 0.0
      %1210 = vmatpush1.msra.mxu0 0.0
      %1211 = vmatprep.subr.mxu0 0.0
      %1212 = vmatpush1.msra.mxu0 0.0
      %1213 = vmatprep.subr.mxu0 0.0
      %1214 = vmatpush1.msra.mxu0 0.0
      %1215 = vmatprep.subr.mxu0 0.0
      %1216 = vmatpush1.msra.mxu0 0.0
      %1217 = vmatprep.subr.mxu0 0.0
      %1218 = vmatpush1.msra.mxu0 0.0
      %1219 = vmatprep.subr.mxu0 0.0
      %1220 = vmatpush1.msra.mxu0 0.0
      %1221 = vmatprep.subr.mxu0 0.0
      %1222 = vmatpush1.msra.mxu0 0.0
      %1223 = vmatprep.subr.mxu0 0.0
      %1224 = vmatpush1.msra.mxu0 0.0
      %1225 = vmatprep.subr.mxu0 0.0
      %1226 = vmatpush1.msra.mxu0 0.0
      %1227 = vmatprep.subr.mxu0 0.0
      %1228 = vmatpush1.msra.mxu0 0.0
      %1229 = vmatprep.subr.mxu0 0.0
      %1230 = vmatpush1.msra.mxu0 0.0
      %1231 = vmatprep.subr.mxu0 0.0
      %1232 = vmatpush1.msra.mxu0 0.0
      %1233 = vmatprep.subr.mxu0 0.0
      %1234 = vmatpush1.msra.mxu0 0.0
      %1235 = vmatprep.subr.mxu0 0.0
      %1236 = vmatpush1.msra.mxu0 0.0
      %1237 = vmatprep.subr.mxu0 0.0
      %1238 = vmatpush1.msra.mxu0 0.0
      %1239 = vmatprep.subr.mxu0 0.0
      %1240 = vmatpush1.msra.mxu0 0.0
      %1241 = vmatprep.subr.mxu0 0.0
      %1242 = vmatpush1.msra.mxu0 0.0
      %1243 = vmatprep.subr.mxu0 0.0
      %1244 = vmatpush1.msra.mxu0 0.0
      %1245 = vmatprep.subr.mxu0 0.0
      %1246 = vmatpush1.msra.mxu0 0.0
      %1247 = vmatprep.subr.mxu0 0.0
      %1248 = vmatpush1.msra.mxu0 0.0
      %1249 = vmatprep.subr.mxu0 0.0
      %1250 = vmatpush1.msra.mxu0 0.0
      %1251 = vmatprep.subr.mxu0 0.0
      %1252 = vmatpush1.msra.mxu0 0.0
      %1253 = vmatprep.subr.mxu0 0.0
      %1254 = vmatpush1.msra.mxu0 0.0
      %1255 = vmatprep.mubr.f32.mxu0 0.0
      %1256 = vmatmul.mubr.f32.gmra.mrb[0].mxu0 %v1180
      %v1257 = vpop.f32.mrb[0].mxu0
      %v1258 = vadd.f32 0.0, %v1257
      %v1259 = vpop.f32.mrb[0].mxu0
      %v1260 = vadd.f32 0.0, %v1259
      %1261 = vmatprep.mubr.f32.mxu0 0.0
      %1262 = vmatmul.mubr.f32.gmra.mrb[0].mxu0 %v1183
      %v1263 = vpop.f32.mrb[0].mxu0
      %v1264 = vadd.f32 0.0, %v1263
      %v1265 = vpop.f32.mrb[0].mxu0
      %v1266 = vadd.f32 0.0, %v1265
      %1267 = vmatprep.mubr.f32.mxu0 0.0
      %1268 = vmatmul.mubr.f32.gmra.mrb[0].mxu0 %v1186
      %v1269 = vpop.f32.mrb[0].mxu0
      %v1270 = vadd.f32 0.0, %v1269
      %v1271 = vpop.f32.mrb[0].mxu0
      %v1272 = vadd.f32 0.0, %v1271
      %1273 = vmatprep.mubr.f32.mxu0 0.0
      %1274 = vmatmul.mubr.f32.gmra.mrb[0].mxu0 %v1189
      %v1275 = vpop.f32.mrb[0].mxu0
      %v1276 = vadd.f32 0.0, %v1275
      %v1277 = vpop.f32.mrb[0].mxu0
      %v1278 = vadd.f32 0.0, %v1277
      %1279 = vdwg.mxu0
      %v1280 = vld [vmem:[%s7] sm:$0xff]
      %v1281 = vld [vmem:[%s7 + $0x8] sm:$0xff]
      %v1282 = vld [vmem:[%s7 + $0x10] sm:$0xff]
      %v1283 = vld [vmem:[%s7 + $0x18] sm:$0xff]
      %1285 = vset.pattern.permute.xlu0 0
      %1286 = vperm.xlu0 %1285, %v1280
      %v1287 = vpop.permute.xlu0 %1286
      %1290 = vset.pattern.permute.xlu0 0
      %1291 = vperm.xlu0 %1290, %v1281
      %v1292 = vpop.permute.xlu0 %1291
      %1295 = vset.pattern.permute.xlu0 0
      %1296 = vperm.xlu0 %1295, %v1282
      %v1297 = vpop.permute.xlu0 %1296
      %1300 = vset.pattern.permute.xlu0 0
      %1301 = vperm.xlu0 %1300, %v1283
      %v1302 = vpop.permute.xlu0 %1301
      %v1304 = vmul.f32 %v1258, %v1287
      %v1305 = vmul.f32 %v1260, %v1287
      %v1306 = vmul.f32 %v1264, %v1292
      %v1307 = vmul.f32 %v1266, %v1292
      %v1308 = vmul.f32 %v1270, %v1297
      %v1309 = vmul.f32 %v1272, %v1297
      %v1310 = vmul.f32 %v1276, %v1302
      %v1311 = vmul.f32 %v1278, %v1302
      %1312 = vset.pattern.permute.xlu0 1
      %1313 = vperm.xlu0 %1312, %v1280
      %v1314 = vpop.permute.xlu0 %1313
      %1316 = vset.pattern.permute.xlu0 1
      %1317 = vperm.xlu0 %1316, %v1281
      %v1318 = vpop.permute.xlu0 %1317
      %1320 = vset.pattern.permute.xlu0 1
      %1321 = vperm.xlu0 %1320, %v1282
      %v1322 = vpop.permute.xlu0 %1321
      %1324 = vset.pattern.permute.xlu0 1
      %1325 = vperm.xlu0 %1324, %v1283
      %v1326 = vpop.permute.xlu0 %1325
      %v1328 = vadd.f32 %v1304, %v1314
      %v1329 = vadd.f32 %v1305, %v1314
      %v1330 = vadd.f32 %v1306, %v1318
      %v1331 = vadd.f32 %v1307, %v1318
      %v1332 = vadd.f32 %v1308, %v1322
      %v1333 = vadd.f32 %v1309, %v1322
      %v1334 = vadd.f32 %v1310, %v1326
      %v1335 = vadd.f32 %v1311, %v1326
      %v1336 = vmax.f32 %v1328, 0.0
      %v1337 = vmax.f32 %v1329, 0.0
      %v1338 = vmax.f32 %v1330, 0.0
      %v1339 = vmax.f32 %v1331, 0.0
      %v1340 = vmax.f32 %v1332, 0.0
      %v1341 = vmax.f32 %v1333, 0.0
      %v1342 = vmax.f32 %v1334, 0.0
      %v1343 = vmax.f32 %v1335, 0.0
      %v1344 = vld [vmem:[%s4] sm:$0xff]
      %v1345 = vld [vmem:[%s4 + $0x8] sm:$0xff]
      %vm1346 = vcmask 261120
      %v1348 = vsel %vm1346, %v1344, 0
      %v1351 = vsel %vm1346, %v1345, 0
      %1353 = vmatprep.subr.mxu0 %v1337
      %1354 = vmatpush1.msra.mxu0 %v1336
      %1355 = vmatprep.subr.mxu0 %v1339
      %1356 = vmatpush1.msra.mxu0 %v1338
      %1357 = vmatprep.subr.mxu0 %v1341
      %1358 = vmatpush1.msra.mxu0 %v1340
      %1359 = vmatprep.subr.mxu0 %v1343
      %1360 = vmatpush1.msra.mxu0 %v1342
      %1361 = vmatprep.subr.mxu0 0.0
      %1362 = vmatpush1.msra.mxu0 0.0
      %1363 = vmatprep.subr.mxu0 0.0
      %1364 = vmatpush1.msra.mxu0 0.0
      %1365 = vmatprep.subr.mxu0 0.0
      %1366 = vmatpush1.msra.mxu0 0.0
      %1367 = vmatprep.subr.mxu0 0.0
      %1368 = vmatpush1.msra.mxu0 0.0
      %1369 = vmatprep.subr.mxu0 0.0
      %1370 = vmatpush1.msra.mxu0 0.0
      %1371 = vmatprep.subr.mxu0 0.0
      %1372 = vmatpush1.msra.mxu0 0.0
      %1373 = vmatprep.subr.mxu0 0.0
      %1374 = vmatpush1.msra.mxu0 0.0
      %1375 = vmatprep.subr.mxu0 0.0
      %1376 = vmatpush1.msra.mxu0 0.0
      %1377 = vmatprep.subr.mxu0 0.0
      %1378 = vmatpush1.msra.mxu0 0.0
      %1379 = vmatprep.subr.mxu0 0.0
      %1380 = vmatpush1.msra.mxu0 0.0
      %1381 = vmatprep.subr.mxu0 0.0
      %1382 = vmatpush1.msra.mxu0 0.0
      %1383 = vmatprep.subr.mxu0 0.0
      %1384 = vmatpush1.msra.mxu0 0.0
      %1385 = vmatprep.subr.mxu0 0.0
      %1386 = vmatpush1.msra.mxu0 0.0
      %1387 = vmatprep.subr.mxu0 0.0
      %1388 = vmatpush1.msra.mxu0 0.0
      %1389 = vmatprep.subr.mxu0 0.0
      %1390 = vmatpush1.msra.mxu0 0.0
      %1391 = vmatprep.subr.mxu0 0.0
      %1392 = vmatpush1.msra.mxu0 0.0
      %1393 = vmatprep.subr.mxu0 0.0
      %1394 = vmatpush1.msra.mxu0 0.0
      %1395 = vmatprep.subr.mxu0 0.0
      %1396 = vmatpush1.msra.mxu0 0.0
      %1397 = vmatprep.subr.mxu0 0.0
      %1398 = vmatpush1.msra.mxu0 0.0
      %1399 = vmatprep.subr.mxu0 0.0
      %1400 = vmatpush1.msra.mxu0 0.0
      %1401 = vmatprep.subr.mxu0 0.0
      %1402 = vmatpush1.msra.mxu0 0.0
      %1403 = vmatprep.subr.mxu0 0.0
      %1404 = vmatpush1.msra.mxu0 0.0
      %1405 = vmatprep.subr.mxu0 0.0
      %1406 = vmatpush1.msra.mxu0 0.0
      %1407 = vmatprep.subr.mxu0 0.0
      %1408 = vmatpush1.msra.mxu0 0.0
      %1409 = vmatprep.subr.mxu0 0.0
      %1410 = vmatpush1.msra.mxu0 0.0
      %1411 = vmatprep.subr.mxu0 0.0
      %1412 = vmatpush1.msra.mxu0 0.0
      %1413 = vmatprep.subr.mxu0 0.0
      %1414 = vmatpush1.msra.mxu0 0.0
      %1415 = vmatprep.subr.mxu0 0.0
      %1416 = vmatpush1.msra.mxu0 0.0
      %1417 = vmatprep.mubr.f32.mxu0 0.0
      %1418 = vmatmul.mubr.f32.gmra.mrb[0].mxu0 %v1348
      %v1419 = vpop.f32.mrb[0].mxu0
      %v1420 = vadd.f32 0.0, %v1419
      %v1421 = vpop.f32.mrb[0].mxu0
      %v1422 = vadd.f32 0.0, %v1421
      %1423 = vmatprep.mubr.f32.mxu0 0.0
      %1424 = vmatmul.mubr.f32.gmra.mrb[0].mxu0 %v1351
      %v1425 = vpop.f32.mrb[0].mxu0
      %v1426 = vadd.f32 0.0, %v1425
      %v1427 = vpop.f32.mrb[0].mxu0
      %v1428 = vadd.f32 0.0, %v1427
      %1429 = vdwg.mxu0
      %v1430 = vld [vmem:[%s8] sm:$0xff]
      %v1431 = vld [vmem:[%s8 + $0x8] sm:$0xff]
      %1433 = vset.pattern.permute.xlu0 0
      %1434 = vperm.xlu0 %1433, %v1430
      %v1435 = vpop.permute.xlu0 %1434
      %1438 = vset.pattern.permute.xlu0 0
      %1439 = vperm.xlu0 %1438, %v1431
      %v1440 = vpop.permute.xlu0 %1439
      %v1442 = vmul.f32 %v1420, %v1435
      %v1443 = vmul.f32 %v1422, %v1435
      %v1444 = vmul.f32 %v1426, %v1440
      %v1445 = vmul.f32 %v1428, %v1440
      %1446 = vset.pattern.permute.xlu0 1
      %1447 = vperm.xlu0 %1446, %v1430
      %v1448 = vpop.permute.xlu0 %1447
      %1450 = vset.pattern.permute.xlu0 1
      %1451 = vperm.xlu0 %1450, %v1431
      %v1452 = vpop.permute.xlu0 %1451
      %v1454 = vadd.f32 %v1442, %v1448
      %v1455 = vadd.f32 %v1443, %v1448
      %v1456 = vadd.f32 %v1444, %v1452
      %v1457 = vadd.f32 %v1445, %v1452
      %v1458 = vmax.f32 %v1454, 0.0
      %v1459 = vmax.f32 %v1455, 0.0
      %v1460 = vmax.f32 %v1456, 0.0
      %v1461 = vmax.f32 %v1457, 0.0
      %1462 = vst [vmem:[%s329] sm:$0xff] %v1458
      %1463 = vst [vmem:[%s329 + $0x8] sm:$0xff] %v1459
      %1464 = vst [vmem:[%s329 + $0x10] sm:$0xff] %v1460
      %1465 = vst [vmem:[%s329 + $0x18] sm:$0xff] %v1461
      %p1466 = scmp.lt.s32.totalorder %s20, 1
      %s1467 = scalar_select %p1466, %s20, 1
      %s1468 = smul.addr %s1467, 4
      %s1469 = smul.addr %s1468, 8
      %s1470 = scalar_lea.vmem %s9, %s1469
      // Predicated region
      $region57: #{cnn_layers_1_forward.1} parent=55 // pred_check
        %p1471 = pneg %p232
      $region58: #{cnn_layers_1_forward.1} parent=55 // pred_check_branch
        %1473 = sbr.rel (%p1471) target = $region60
      $region59: #{cnn_layers_1_forward.1} parent=55 // pred_region
        _
      $region60: #{cnn_layers_1_forward.1} parent=55 // pred_fallthru
        _
    $region56: #{cnn_layers_1_forward.1} parent=5 // pred_fallthru
      _
    %p1474 = scmp.le.s32.totalorder 2, %s15
    // Predicated region
    $region61: #{cnn_layers_1_forward.1} parent=5 // pred_check
      %p1475 = pneg %p1474
    $region62: #{cnn_layers_1_forward.1} parent=5 // pred_check_branch
      %1477 = sbr.rel (%p1475) target = $region64
    $region63: #{cnn_layers_1_forward.1} parent=5 // pred_region
      %s1478 = ssub.s32 %s15, 2
      // Predicated region
      $region65: #{cnn_layers_1_forward.1} parent=63 // pred_check
        %p1479 = pneg %p238
      $region66: #{cnn_layers_1_forward.1} parent=63 // pred_check_branch
        %1481 = sbr.rel (%p1479) target = $region68
      $region67: #{cnn_layers_1_forward.1} parent=63 // pred_region
        %p1482 = scmp.lt.s32.totalorder %s21, 1
        %s1483 = scalar_select %p1482, %s21, 1
        %s1484 = smul.addr %s1483, 4
        %s1485 = smul.addr %s1484, 8
        %s1486 = scalar_lea.vmem %s9, %s1485
      $region68: #{cnn_layers_1_forward.1} parent=63 // pred_fallthru
        _
    $region64: #{cnn_layers_1_forward.1} parent=5 // pred_fallthru
      _
  $region6: #{cnn_layers_1_forward.1} parent=0 // loop_footer
    %s19 = sadd.s32 1, %s15
  $region7: #{cnn_layers_1_forward.1} parent=0 // loop_footer_branch
    %14 = sbr.rel target = $region3
  $region8: #{cnn_layers_1_forward.1} parent=0 // loop_exit
    _

</llo_original>
